<compile_context>
chip_gen: v5e
topology: v5e:2x2
jax: 0.10.0
libtpu: 0.0.40
codegen_flags: <defaults>
</compile_context>

<pallas_src>
import functools

import jax
import jax.numpy as jnp
from jax import lax
from jax.experimental import pallas as pl
from jax.experimental.pallas import tpu as pltpu

LATENT_DIM = 32
CHANNELS = 3
INIT_SIZE = 7
K = 3
EPS = 1e-5
VMEM_LIMIT = 48 * 1024 * 1024   # v7x has 64 MiB/TC; leave headroom
ROW_TILE = 16                   # conv output rows per grid step
BN_ROW_TILE = 64                # BN/ReLU rows per grid step


# ----------------------------- Pallas kernels ------------------------------

def _conv_tile(x_ref, w_ref, row0, TH, Wo):
    """Transposed conv for one tile of TH output rows: K*K MXU matmuls.

    x_ref: (1, Hp_ext, Wp, Cin) full zero-dilated + padded image (bf16)
    w_ref: (K, K, Cin, Cout) spatially-flipped, (ci,co)-transposed weights (bf16)
    returns f32 accumulator of shape (TH*Wo, Cout)
    """
    Cin = x_ref.shape[3]
    Cout = w_ref.shape[3]
    acc = jnp.zeros((TH * Wo, Cout), jnp.float32)
    for kh in range(K):
        for kw in range(K):
            patch = x_ref[0, pl.ds(row0 + kh, TH), kw:kw + Wo, :]
            acc = acc + jnp.dot(patch.reshape(TH * Wo, Cin), w_ref[kh, kw],
                                preferred_element_type=jnp.float32)
    return acc


def convt_stats_kernel(x_ref, w_ref, y_ref, stats_ref):
    """ConvTranspose2d row tile (bias skipped: absorbed by the following BN)
    plus per-tile per-channel sum / sum-of-squares (for BatchNorm)."""
    TH, Wo, Cout = y_ref.shape[1], y_ref.shape[2], y_ref.shape[3]
    row0 = pl.multiple_of(pl.program_id(1) * TH, TH)
    acc = _conv_tile(x_ref, w_ref, row0, TH, Wo)
    y_ref[0] = acc.reshape(TH, Wo, Cout).astype(y_ref.dtype)
    # Rows beyond Ho (row-tiling overhang) are exactly zero (zero input rows,
    # no bias), so summing the full tile keeps the batch statistics exact.
    stats_ref[0, 0, 0:1, :] = jnp.sum(acc, axis=0, keepdims=True)
    stats_ref[0, 0, 1:2, :] = jnp.sum(acc * acc, axis=0, keepdims=True)


def convt_tanh_kernel(x_ref, w_ref, b_ref, y_ref):
    """Final ConvTranspose2d row tile (+ bias) followed by tanh."""
    TH, Wo, Cout = y_ref.shape[1], y_ref.shape[2], y_ref.shape[3]
    row0 = pl.multiple_of(pl.program_id(1) * TH, TH)
    acc = _conv_tile(x_ref, w_ref, row0, TH, Wo) + b_ref[...]
    y_ref[0] = jnp.tanh(acc).reshape(TH, Wo, Cout).astype(y_ref.dtype)


def bn_relu_kernel(y_ref, stats_ref, gamma_ref, beta_ref, o_ref, *, count):
    """Training-mode BatchNorm2d (batch stats, biased variance) + ReLU, bf16 out."""
    mean = stats_ref[0:1, :] / count                      # (1, C)
    var = stats_ref[1:2, :] / count - mean * mean         # (1, C)
    scale = gamma_ref[...] * lax.rsqrt(var + EPS)         # (1, C)
    shift = beta_ref[...] - mean * scale                  # (1, C)
    C = o_ref.shape[3]
    x = y_ref[...].astype(jnp.float32)
    o_ref[...] = jnp.maximum(x * scale.reshape(1, 1, 1, C)
                             + shift.reshape(1, 1, 1, C),
                             0.0).astype(o_ref.dtype)


def linear_kernel(z_ref, w_ref, b_ref, o_ref):
    o_ref[...] = (jnp.dot(z_ref[...], w_ref[...],
                          preferred_element_type=jnp.float32)
                  + b_ref[...]).astype(o_ref.dtype)


# ------------------------------ JAX wrappers --------------------------------

def linear(z, w, b):
    B, Nout = z.shape[0], w.shape[1]
    return pl.pallas_call(
        linear_kernel,
        out_shape=jax.ShapeDtypeStruct((B, Nout), jnp.bfloat16),
        compiler_params=pltpu.CompilerParams(vmem_limit_bytes=VMEM_LIMIT),
    )(z.astype(jnp.bfloat16), w.astype(jnp.bfloat16), b)


def conv_transpose_nhwc(x, w_torch, b, stride, *, activation):
    """x: (N,H,W,Cin) bf16, w_torch: (Cin,Cout,K,K) f32, b: (Cout,) f32."""
    N, H, W, Cin = x.shape
    Cout = w_torch.shape[1]
    Ho = (H - 1) * stride + K
    Wo = (W - 1) * stride + K
    TH = min(ROW_TILE, Ho)
    R = (Ho + TH - 1) // TH

    # Glue (pure data movement, bf16): zero-dilate by (stride-1), pad by K-1,
    # plus extra zero rows at the bottom so row tiles never read out of bounds.
    extra_h = R * TH - Ho
    xp = lax.pad(x, jnp.array(0.0, x.dtype),
                 ((0, 0, 0),
                  (K - 1, K - 1 + extra_h, stride - 1),
                  (K - 1, K - 1, stride - 1),
                  (0, 0, 0)))
    Hp, Wp = xp.shape[1], xp.shape[2]
    wf = jnp.flip(jnp.transpose(w_torch, (2, 3, 0, 1)),
                  axis=(0, 1)).astype(jnp.bfloat16)        # (K,K,Cin,Cout) bf16

    x_spec = pl.BlockSpec((1, Hp, Wp, Cin), lambda n, r: (n, 0, 0, 0))
    w_spec = pl.BlockSpec((K, K, Cin, Cout), lambda n, r: (0, 0, 0, 0))
    y_spec = pl.BlockSpec((1, TH, Wo, Cout), lambda n, r: (n, r, 0, 0))
    cp = pltpu.CompilerParams(dimension_semantics=("parallel", "parallel"),
                              vmem_limit_bytes=VMEM_LIMIT)

    if activation == "tanh":
        return pl.pallas_call(
            convt_tanh_kernel,
            grid=(N, R),
            in_specs=[x_spec, w_spec,
                      pl.BlockSpec((1, Cout), lambda n, r: (0, 0))],
            out_specs=y_spec,
            out_shape=jax.ShapeDtypeStruct((N, Ho, Wo, Cout), jnp.float32),
            compiler_params=cp,
        )(xp, wf, b.reshape(1, Cout))

    y, stats = pl.pallas_call(
        convt_stats_kernel,
        grid=(N, R),
        in_specs=[x_spec, w_spec],
        out_specs=(y_spec,
                   pl.BlockSpec((1, 1, 2, Cout), lambda n, r: (n, r, 0, 0))),
        out_shape=(jax.ShapeDtypeStruct((N, Ho, Wo, Cout), jnp.bfloat16),
                   jax.ShapeDtypeStruct((N, R, 2, Cout), jnp.float32)),
        compiler_params=cp,
    )(xp, wf)
    # Tiny reduction of per-(sample, row-tile) partial sums -> (2, Cout).
    return y, jnp.sum(stats, axis=(0, 1))


def batchnorm_relu(y, stats_sum, gamma, beta):
    N, Ho, Wo, C = y.shape
    TH = min(BN_ROW_TILE, Ho)
    R = (Ho + TH - 1) // TH
    kern = functools.partial(bn_relu_kernel, count=float(N * Ho * Wo))
    return pl.pallas_call(
        kern,
        grid=(N, R),
        in_specs=[pl.BlockSpec((1, TH, Wo, C), lambda n, r: (n, r, 0, 0)),
                  pl.BlockSpec((2, C), lambda n, r: (0, 0)),
                  pl.BlockSpec((1, C), lambda n, r: (0, 0)),
                  pl.BlockSpec((1, C), lambda n, r: (0, 0))],
        out_specs=pl.BlockSpec((1, TH, Wo, C), lambda n, r: (n, r, 0, 0)),
        out_shape=jax.ShapeDtypeStruct((N, Ho, Wo, C), jnp.bfloat16),
        compiler_params=pltpu.CompilerParams(
            dimension_semantics=("parallel", "parallel"),
            vmem_limit_bytes=VMEM_LIMIT),
    )(y, stats_sum, gamma, beta)


# ------------------------------ parameters ----------------------------------

CONV_CFG = [  # (Cin, Cout, stride) — matches the nn.Sequential exactly
    (256, 256, 2), (256, 256, 1), (256, 256, 2), (256, 256, 1),
    (256, 128, 2), (128, 64, 2), (64, CHANNELS, 1),
]


def init_params(key):
    keys = iter(jax.random.split(key, 2 + 4 * len(CONV_CFG)))
    p = {
        "l1_w": 0.05 * jax.random.normal(next(keys),
                                         (LATENT_DIM, 256 * INIT_SIZE ** 2),
                                         jnp.float32),
        "l1_b": 0.05 * jax.random.normal(next(keys),
                                         (1, 256 * INIT_SIZE ** 2),
                                         jnp.float32),
        "convs": [],
    }
    for li, (cin, cout, stride) in enumerate(CONV_CFG):
        w = 0.05 * jax.random.normal(next(keys), (cin, cout, K, K), jnp.float32)
        b = 0.05 * jax.random.normal(next(keys), (cout,), jnp.float32)
        if li < len(CONV_CFG) - 1:
            gamma = 1.0 + 0.1 * jax.random.normal(next(keys), (1, cout), jnp.float32)
            beta = 0.1 * jax.random.normal(next(keys), (1, cout), jnp.float32)
        else:
            gamma, beta = None, None
        # NOTE: the conv bias `b` is kept for module parity but not applied on
        # BN layers (training-mode BatchNorm absorbs a per-channel bias exactly).
        p["convs"].append(dict(w=w, b=b, gamma=gamma, beta=beta, stride=stride))
    return p


def generator_forward(params, z):
    B = z.shape[0]
    out = linear(z, params["l1_w"], params["l1_b"])              # (B, 256*7*7) bf16
    out = out.reshape(B, 256, INIT_SIZE, INIT_SIZE)              # PyTorch .view (NCHW)
    x = jnp.transpose(out, (0, 2, 3, 1))                         # -> NHWC for kernels

    for layer in params["convs"][:-1]:
        y, stats = conv_transpose_nhwc(x, layer["w"], layer["b"],
                                       layer["stride"], activation="bn")
        x = batchnorm_relu(y, stats, layer["gamma"], layer["beta"])

    last = params["convs"][-1]
    img = conv_transpose_nhwc(x, last["w"], last["b"], last["stride"],
                              activation="tanh")
    return jnp.transpose(img, (0, 3, 1, 2))                      # back to NCHW


# TODO(synk): BatchNorm running-statistics updates (training-time buffers) are
# not emitted; they do not affect the forward output.

if __name__ == "__main__":
    key = jax.random.PRNGKey(0)
    pkey, zkey = jax.random.split(key)
    params = init_params(pkey)
    z = jax.random.normal(zkey, (2, LATENT_DIM), jnp.float32)

    img = generator_forward(params, z)
    img = jax.block_until_ready(img)

    # 7x7 -> 15 -> 17 -> 35 -> 37 -> 75 -> 151 -> 153
    assert img.shape == (2, CHANNELS, 153, 153), img.shape
    assert img.dtype == jnp.float32
    assert bool(jnp.isfinite(img).all())
    assert float(jnp.abs(img).max()) <= 1.0 + 1e-5  # tanh range
    print("KERNEL_OK")
</pallas_src>

<mosaic_0001>
module attributes {stable_mosaic.version = 11 : i64} {
  func.func @linear_kernel(%arg0: memref<2x32xbf16, #tpu.memory_space<vmem>>, %arg1: memref<32x12544xbf16, #tpu.memory_space<vmem>>, %arg2: memref<1x12544xf32, #tpu.memory_space<vmem>>, %arg3: memref<2x12544xbf16, #tpu.memory_space<vmem>>) attributes {dimension_semantics = [], scalar_prefetch = 0 : i64, scratch_operands = 0 : i64, tpu.core_type = #tpu.core_type<tc>} {
    %c0 = arith.constant 0 : index
    %c0_0 = arith.constant 0 : index
    %0 = vector.load %arg0[%c0, %c0_0] : memref<2x32xbf16, #tpu.memory_space<vmem>>, vector<2x32xbf16>
    %c0_1 = arith.constant 0 : index
    %c0_2 = arith.constant 0 : index
    %1 = vector.load %arg1[%c0_1, %c0_2] : memref<32x12544xbf16, #tpu.memory_space<vmem>>, vector<32x12544xbf16>
    %cst = arith.constant dense<0.000000e+00> : vector<2x12544xf32>
    %2 = tpu.matmul %0, %1, %cst {dimension_numbers = #tpu.dot_dimension_numbers<[1], [0], [0], [1], [0, 0, 1, 1], [], []>} : vector<2x32xbf16>, vector<32x12544xbf16>, vector<2x12544xf32> -> vector<2x12544xf32>
    %c0_3 = arith.constant 0 : index
    %c0_4 = arith.constant 0 : index
    %3 = vector.load %arg2[%c0_3, %c0_4] : memref<1x12544xf32, #tpu.memory_space<vmem>>, vector<1x12544xf32>
    %4 = vector.broadcast %3 : vector<1x12544xf32> to vector<2x12544xf32>
    %5 = arith.addf %2, %4 : vector<2x12544xf32>
    %6 = arith.truncf %5 : vector<2x12544xf32> to vector<2x12544xbf16>
    %c0_5 = arith.constant 0 : index
    %c0_6 = arith.constant 0 : index
    %7 = vector.load %arg3[%c0_5, %c0_6] : memref<2x12544xbf16, #tpu.memory_space<vmem>>, vector<2x12544xbf16>
    tpu.vector_store %arg3[%c0_5, %c0_6], %6 {strides = array<i32>} : memref<2x12544xbf16, #tpu.memory_space<vmem>>, vector<2x12544xbf16>,
    return
  }
}

</mosaic_0001>

<llo_original>
// kernel: tpu_custom_call.1
$region0: #{tpu_custom_call.1}
  #allocation0 [shape = 'u32[]', space=smem, size = 0x4, offset = 0x4, fixed_abs, tag = 'smem constant byte address 0x4 - core index']
  #allocation1 [shape = 'u32[72,128]{1,0:T(1,128)}', space=vmem, size = 0x9000, scoped, tag = 'internal scratch']
  %s0 = inlined_call_operand.hbm [shape: bf16[2,32], index: 0, kind: input, shape index: {}]
  %s1 = inlined_call_operand.hbm [shape: bf16[32,12544], index: 1, kind: input, shape index: {}]
  %s2 = inlined_call_operand.hbm [shape: f32[1,12544], index: 2, kind: input, shape index: {}]
  %s3 = inlined_call_operand.hbm [shape: bf16[2,12544], index: 3, kind: output, shape index: {}]
  %s4 = sld [smem:[#allocation0]]
  $region34: #{tpu_custom_call.1} parent=0
    _
  %s6 = ssub.s32 1, %s4
  %s7 = scalar_select 0, %s6, %s4
  $region1: #{tpu_custom_call.1} parent=0
    #allocation2 [shape = 'u8[512]{0}', space=vmem, size = 0x400, scoped, tag = 'input window, operand 0, single buffered']
    #allocation3 [shape = 's32[1]{0}', space=sflag, size = 0x4, scoped, tag = 'scoped memory for tpu_custom_call.1']
    #allocation4 [shape = 's32[1]{0}', space=sflag, size = 0x4, scoped, tag = 'scoped memory for tpu_custom_call.1']
    #allocation5 [shape = 'u8[802816]{0}', space=vmem, size = 0xc4000, scoped, tag = 'input window, operand 1, single buffered']
    #allocation6 [shape = 's32[1]{0}', space=sflag, size = 0x4, scoped, tag = 'scoped memory for tpu_custom_call.1']
    #allocation7 [shape = 'u8[50176]{0}', space=vmem, size = 0xc400, scoped, tag = 'input window, operand 2, single buffered']
    #allocation8 [shape = 'u8[50176]{0}', space=vmem, size = 0xc400, scoped, tag = 'output window, operand 0, single buffered']
    %8 = vsyncpa [#allocation3], 0
    %9 = vsyncpa [#allocation6], 0
    %10 = vsyncpa [#allocation4], 0
    // Predicated region
    $region2: #{tpu_custom_call.1} parent=1 // pred_check
      _
    $region3: #{tpu_custom_call.1} parent=1 // pred_check_branch
      %12 = sbr.rel (0) target = $region5
    $region4: #{tpu_custom_call.1} parent=1 // pred_region
      %14 = vsyncadd [#allocation3], 0
      %s16 = sshll.u32 %s0, 4
      %s17 = int_to_ptr.hbm [resolvable:$true] %s16
      %s18 = sshll.u32 [#allocation2], 4
      %s19 = int_to_ptr.vmem [resolvable:$true] %s18
      %21 = dma.hbm_to_vmem [thread:$0]  %s17, 16, %s19, [#allocation3]
    $region5: #{tpu_custom_call.1} parent=1 // pred_fallthru
      _
    // Predicated region
    $region6: #{tpu_custom_call.1} parent=1 // pred_check
      _
    $region7: #{tpu_custom_call.1} parent=1 // pred_check_branch
      %23 = sbr.rel (0) target = $region9
    $region8: #{tpu_custom_call.1} parent=1 // pred_region
      %25 = vsyncadd [#allocation6], 0
      %s26 = sshll.u32 %s1, 4
      %s27 = int_to_ptr.hbm [resolvable:$true] %s26
      %s28 = sshll.u32 [#allocation5], 4
      %s29 = int_to_ptr.vmem [resolvable:$true] %s28
      %34 = dma.hbm_to_vmem [thread:$0]  %s27, 25088, %s29, [#allocation6], 6272, 6272, 392
    $region9: #{tpu_custom_call.1} parent=1 // pred_fallthru
      _
    // Predicated region
    $region10: #{tpu_custom_call.1} parent=1 // pred_check
      _
    $region11: #{tpu_custom_call.1} parent=1 // pred_check_branch
      %36 = sbr.rel (0) target = $region13
    $region12: #{tpu_custom_call.1} parent=1 // pred_region
      %38 = vsyncadd [#allocation6], 0
      %s40 = sshll.u32 %s2, 4
      %s41 = int_to_ptr.hbm [resolvable:$true] %s40
      %s42 = sshll.u32 [#allocation7], 4
      %s43 = int_to_ptr.vmem [resolvable:$true] %s42
      %45 = dma.hbm_to_vmem [thread:$0]  %s41, 1568, %s43, [#allocation6]
    $region13: #{tpu_custom_call.1} parent=1 // pred_fallthru
      _
    // Predicated region
    $region14: #{tpu_custom_call.1} parent=1 // pred_check
      _
    $region15: #{tpu_custom_call.1} parent=1 // pred_check_branch
      %47 = sbr.rel (0) target = $region17
    $region16: #{tpu_custom_call.1} parent=1 // pred_region
      %49 = dma.done [#allocation3], 16
    $region17: #{tpu_custom_call.1} parent=1 // pred_fallthru
      _
    // Predicated region
    $region18: #{tpu_custom_call.1} parent=1 // pred_check
      _
    $region19: #{tpu_custom_call.1} parent=1 // pred_check_branch
      %51 = sbr.rel (0) target = $region21
    $region20: #{tpu_custom_call.1} parent=1 // pred_region
      %53 = dma.done [#allocation6], 25088
    $region21: #{tpu_custom_call.1} parent=1 // pred_fallthru
      _
    // Predicated region
    $region22: #{tpu_custom_call.1} parent=1 // pred_check
      _
    $region23: #{tpu_custom_call.1} parent=1 // pred_check_branch
      %55 = sbr.rel (0) target = $region25
    $region24: #{tpu_custom_call.1} parent=1 // pred_region
      %57 = dma.done [#allocation6], 1568
    $region25: #{tpu_custom_call.1} parent=1 // pred_fallthru
      _
    %v59 = vld [vmem:[#allocation2] sm:$0x1]
    %v60 = vld [vmem:[#allocation5] sm:$0xff]
    %v61 = vld [vmem:[#allocation5 + $0x8] sm:$0xff]
    %v62 = vld [vmem:[#allocation5 + $0x10] sm:$0xff]
    %v63 = vld [vmem:[#allocation5 + $0x18] sm:$0xff]
    %v64 = vld [vmem:[#allocation5 + $0x20] sm:$0xff]
    %v65 = vld [vmem:[#allocation5 + $0x28] sm:$0xff]
    %v66 = vld [vmem:[#allocation5 + $0x30] sm:$0xff]
    %v67 = vld [vmem:[#allocation5 + $0x38] sm:$0xff]
    %v68 = vld [vmem:[#allocation5 + $0x40] sm:$0xff]
    %v69 = vld [vmem:[#allocation5 + $0x48] sm:$0xff]
    %v70 = vld [vmem:[#allocation5 + $0x50] sm:$0xff]
    %v71 = vld [vmem:[#allocation5 + $0x58] sm:$0xff]
    %v72 = vld [vmem:[#allocation5 + $0x60] sm:$0xff]
    %v73 = vld [vmem:[#allocation5 + $0x68] sm:$0xff]
    %v74 = vld [vmem:[#allocation5 + $0x70] sm:$0xff]
    %v75 = vld [vmem:[#allocation5 + $0x78] sm:$0xff]
    %v76 = vld [vmem:[#allocation5 + $0x80] sm:$0xff]
    %v77 = vld [vmem:[#allocation5 + $0x88] sm:$0xff]
    %v78 = vld [vmem:[#allocation5 + $0x90] sm:$0xff]
    %v79 = vld [vmem:[#allocation5 + $0x98] sm:$0xff]
    %v80 = vld [vmem:[#allocation5 + $0xa0] sm:$0xff]
    %v81 = vld [vmem:[#allocation5 + $0xa8] sm:$0xff]
    %v82 = vld [vmem:[#allocation5 + $0xb0] sm:$0xff]
    %v83 = vld [vmem:[#allocation5 + $0xb8] sm:$0xff]
    %v84 = vld [vmem:[#allocation5 + $0xc0] sm:$0xff]
    %v85 = vld [vmem:[#allocation5 + $0xc8] sm:$0xff]
    %v86 = vld [vmem:[#allocation5 + $0xd0] sm:$0xff]
    %v87 = vld [vmem:[#allocation5 + $0xd8] sm:$0xff]
    %v88 = vld [vmem:[#allocation5 + $0xe0] sm:$0xff]
    %v89 = vld [vmem:[#allocation5 + $0xe8] sm:$0xff]
    %v90 = vld [vmem:[#allocation5 + $0xf0] sm:$0xff]
    %v91 = vld [vmem:[#allocation5 + $0xf8] sm:$0xff]
    %v92 = vld [vmem:[#allocation5 + $0x100] sm:$0xff]
    %v93 = vld [vmem:[#allocation5 + $0x108] sm:$0xff]
    %v94 = vld [vmem:[#allocation5 + $0x110] sm:$0xff]
    %v95 = vld [vmem:[#allocation5 + $0x118] sm:$0xff]
    %v96 = vld [vmem:[#allocation5 + $0x120] sm:$0xff]
    %v97 = vld [vmem:[#allocation5 + $0x128] sm:$0xff]
    %v98 = vld [vmem:[#allocation5 + $0x130] sm:$0xff]
    %v99 = vld [vmem:[#allocation5 + $0x138] sm:$0xff]
    %v100 = vld [vmem:[#allocation5 + $0x140] sm:$0xff]
    %v101 = vld [vmem:[#allocation5 + $0x148] sm:$0xff]
    %v102 = vld [vmem:[#allocation5 + $0x150] sm:$0xff]
    %v103 = vld [vmem:[#allocation5 + $0x158] sm:$0xff]
    %v104 = vld [vmem:[#allocation5 + $0x160] sm:$0xff]
    %v105 = vld [vmem:[#allocation5 + $0x168] sm:$0xff]
    %v106 = vld [vmem:[#allocation5 + $0x170] sm:$0xff]
    %v107 = vld [vmem:[#allocation5 + $0x178] sm:$0xff]
    %v108 = vld [vmem:[#allocation5 + $0x180] sm:$0xff]
    %v109 = vld [vmem:[#allocation5 + $0x188] sm:$0xff]
    %v110 = vld [vmem:[#allocation5 + $0x190] sm:$0xff]
    %v111 = vld [vmem:[#allocation5 + $0x198] sm:$0xff]
    %v112 = vld [vmem:[#allocation5 + $0x1a0] sm:$0xff]
    %v113 = vld [vmem:[#allocation5 + $0x1a8] sm:$0xff]
    %v114 = vld [vmem:[#allocation5 + $0x1b0] sm:$0xff]
    %v115 = vld [vmem:[#allocation5 + $0x1b8] sm:$0xff]
    %v116 = vld [vmem:[#allocation5 + $0x1c0] sm:$0xff]
    %v117 = vld [vmem:[#allocation5 + $0x1c8] sm:$0xff]
    %v118 = vld [vmem:[#allocation5 + $0x1d0] sm:$0xff]
    %v119 = vld [vmem:[#allocation5 + $0x1d8] sm:$0xff]
    %v120 = vld [vmem:[#allocation5 + $0x1e0] sm:$0xff]
    %v121 = vld [vmem:[#allocation5 + $0x1e8] sm:$0xff]
    %v122 = vld [vmem:[#allocation5 + $0x1f0] sm:$0xff]
    %v123 = vld [vmem:[#allocation5 + $0x1f8] sm:$0xff]
    %v124 = vld [vmem:[#allocation5 + $0x200] sm:$0xff]
    %v125 = vld [vmem:[#allocation5 + $0x208] sm:$0xff]
    %v126 = vld [vmem:[#allocation5 + $0x210] sm:$0xff]
    %v127 = vld [vmem:[#allocation5 + $0x218] sm:$0xff]
    %v128 = vld [vmem:[#allocation5 + $0x220] sm:$0xff]
    %v129 = vld [vmem:[#allocation5 + $0x228] sm:$0xff]
    %v130 = vld [vmem:[#allocation5 + $0x230] sm:$0xff]
    %v131 = vld [vmem:[#allocation5 + $0x238] sm:$0xff]
    %v132 = vld [vmem:[#allocation5 + $0x240] sm:$0xff]
    %v133 = vld [vmem:[#allocation5 + $0x248] sm:$0xff]
    %v134 = vld [vmem:[#allocation5 + $0x250] sm:$0xff]
    %v135 = vld [vmem:[#allocation5 + $0x258] sm:$0xff]
    %v136 = vld [vmem:[#allocation5 + $0x260] sm:$0xff]
    %v137 = vld [vmem:[#allocation5 + $0x268] sm:$0xff]
    %v138 = vld [vmem:[#allocation5 + $0x270] sm:$0xff]
    %v139 = vld [vmem:[#allocation5 + $0x278] sm:$0xff]
    %v140 = vld [vmem:[#allocation5 + $0x280] sm:$0xff]
    %v141 = vld [vmem:[#allocation5 + $0x288] sm:$0xff]
    %v142 = vld [vmem:[#allocation5 + $0x290] sm:$0xff]
    %v143 = vld [vmem:[#allocation5 + $0x298] sm:$0xff]
    %v144 = vld [vmem:[#allocation5 + $0x2a0] sm:$0xff]
    %v145 = vld [vmem:[#allocation5 + $0x2a8] sm:$0xff]
    %v146 = vld [vmem:[#allocation5 + $0x2b0] sm:$0xff]
    %v147 = vld [vmem:[#allocation5 + $0x2b8] sm:$0xff]
    %v148 = vld [vmem:[#allocation5 + $0x2c0] sm:$0xff]
    %v149 = vld [vmem:[#allocation5 + $0x2c8] sm:$0xff]
    %v150 = vld [vmem:[#allocation5 + $0x2d0] sm:$0xff]
    %v151 = vld [vmem:[#allocation5 + $0x2d8] sm:$0xff]
    %v152 = vld [vmem:[#allocation5 + $0x2e0] sm:$0xff]
    %v153 = vld [vmem:[#allocation5 + $0x2e8] sm:$0xff]
    %v154 = vld [vmem:[#allocation5 + $0x2f0] sm:$0xff]
    %v155 = vld [vmem:[#allocation5 + $0x2f8] sm:$0xff]
    %v156 = vld [vmem:[#allocation5 + $0x300] sm:$0xff]
    %v157 = vld [vmem:[#allocation5 + $0x308] sm:$0xff]
    %v158 = vld [vmem:[#allocation5 + $0x310] sm:$0xff]
    %v159 = vld [vmem:[#allocation5 + $0x318] sm:$0xff]
    %v160 = vld [vmem:[#allocation5 + $0x320] sm:$0xff]
    %v161 = vld [vmem:[#allocation5 + $0x328] sm:$0xff]
    %v162 = vld [vmem:[#allocation5 + $0x330] sm:$0xff]
    %v163 = vld [vmem:[#allocation5 + $0x338] sm:$0xff]
    %v164 = vld [vmem:[#allocation5 + $0x340] sm:$0xff]
    %v165 = vld [vmem:[#allocation5 + $0x348] sm:$0xff]
    %v166 = vld [vmem:[#allocation5 + $0x350] sm:$0xff]
    %v167 = vld [vmem:[#allocation5 + $0x358] sm:$0xff]
    %v168 = vld [vmem:[#allocation5 + $0x360] sm:$0xff]
    %v169 = vld [vmem:[#allocation5 + $0x368] sm:$0xff]
    %v170 = vld [vmem:[#allocation5 + $0x370] sm:$0xff]
    %v171 = vld [vmem:[#allocation5 + $0x378] sm:$0xff]
    %v172 = vld [vmem:[#allocation5 + $0x380] sm:$0xff]
    %v173 = vld [vmem:[#allocation5 + $0x388] sm:$0xff]
    %v174 = vld [vmem:[#allocation5 + $0x390] sm:$0xff]
    %v175 = vld [vmem:[#allocation5 + $0x398] sm:$0xff]
    %v176 = vld [vmem:[#allocation5 + $0x3a0] sm:$0xff]
    %v177 = vld [vmem:[#allocation5 + $0x3a8] sm:$0xff]
    %v178 = vld [vmem:[#allocation5 + $0x3b0] sm:$0xff]
    %v179 = vld [vmem:[#allocation5 + $0x3b8] sm:$0xff]
    %v180 = vld [vmem:[#allocation5 + $0x3c0] sm:$0xff]
    %v181 = vld [vmem:[#allocation5 + $0x3c8] sm:$0xff]
    %v182 = vld [vmem:[#allocation5 + $0x3d0] sm:$0xff]
    %v183 = vld [vmem:[#allocation5 + $0x3d8] sm:$0xff]
    %v184 = vld [vmem:[#allocation5 + $0x3e0] sm:$0xff]
    %v185 = vld [vmem:[#allocation5 + $0x3e8] sm:$0xff]
    %v186 = vld [vmem:[#allocation5 + $0x3f0] sm:$0xff]
    %v187 = vld [vmem:[#allocation5 + $0x3f8] sm:$0xff]
    %v188 = vld [vmem:[#allocation5 + $0x400] sm:$0xff]
    %v189 = vld [vmem:[#allocation5 + $0x408] sm:$0xff]
    %v190 = vld [vmem:[#allocation5 + $0x410] sm:$0xff]
    %v191 = vld [vmem:[#allocation5 + $0x418] sm:$0xff]
    %v192 = vld [vmem:[#allocation5 + $0x420] sm:$0xff]
    %v193 = vld [vmem:[#allocation5 + $0x428] sm:$0xff]
    %v194 = vld [vmem:[#allocation5 + $0x430] sm:$0xff]
    %v195 = vld [vmem:[#allocation5 + $0x438] sm:$0xff]
    %v196 = vld [vmem:[#allocation5 + $0x440] sm:$0xff]
    %v197 = vld [vmem:[#allocation5 + $0x448] sm:$0xff]
    %v198 = vld [vmem:[#allocation5 + $0x450] sm:$0xff]
    %v199 = vld [vmem:[#allocation5 + $0x458] sm:$0xff]
    %v200 = vld [vmem:[#allocation5 + $0x460] sm:$0xff]
    %v201 = vld [vmem:[#allocation5 + $0x468] sm:$0xff]
    %v202 = vld [vmem:[#allocation5 + $0x470] sm:$0xff]
    %v203 = vld [vmem:[#allocation5 + $0x478] sm:$0xff]
    %v204 = vld [vmem:[#allocation5 + $0x480] sm:$0xff]
    %v205 = vld [vmem:[#allocation5 + $0x488] sm:$0xff]
    %v206 = vld [vmem:[#allocation5 + $0x490] sm:$0xff]
    %v207 = vld [vmem:[#allocation5 + $0x498] sm:$0xff]
    %v208 = vld [vmem:[#allocation5 + $0x4a0] sm:$0xff]
    %v209 = vld [vmem:[#allocation5 + $0x4a8] sm:$0xff]
    %v210 = vld [vmem:[#allocation5 + $0x4b0] sm:$0xff]
    %v211 = vld [vmem:[#allocation5 + $0x4b8] sm:$0xff]
    %v212 = vld [vmem:[#allocation5 + $0x4c0] sm:$0xff]
    %v213 = vld [vmem:[#allocation5 + $0x4c8] sm:$0xff]
    %v214 = vld [vmem:[#allocation5 + $0x4d0] sm:$0xff]
    %v215 = vld [vmem:[#allocation5 + $0x4d8] sm:$0xff]
    %v216 = vld [vmem:[#allocation5 + $0x4e0] sm:$0xff]
    %v217 = vld [vmem:[#allocation5 + $0x4e8] sm:$0xff]
    %v218 = vld [vmem:[#allocation5 + $0x4f0] sm:$0xff]
    %v219 = vld [vmem:[#allocation5 + $0x4f8] sm:$0xff]
    %v220 = vld [vmem:[#allocation5 + $0x500] sm:$0xff]
    %v221 = vld [vmem:[#allocation5 + $0x508] sm:$0xff]
    %v222 = vld [vmem:[#allocation5 + $0x510] sm:$0xff]
    %v223 = vld [vmem:[#allocation5 + $0x518] sm:$0xff]
    %v224 = vld [vmem:[#allocation5 + $0x520] sm:$0xff]
    %v225 = vld [vmem:[#allocation5 + $0x528] sm:$0xff]
    %v226 = vld [vmem:[#allocation5 + $0x530] sm:$0xff]
    %v227 = vld [vmem:[#allocation5 + $0x538] sm:$0xff]
    %v228 = vld [vmem:[#allocation5 + $0x540] sm:$0xff]
    %v229 = vld [vmem:[#allocation5 + $0x548] sm:$0xff]
    %v230 = vld [vmem:[#allocation5 + $0x550] sm:$0xff]
    %v231 = vld [vmem:[#allocation5 + $0x558] sm:$0xff]
    %v232 = vld [vmem:[#allocation5 + $0x560] sm:$0xff]
    %v233 = vld [vmem:[#allocation5 + $0x568] sm:$0xff]
    %v234 = vld [vmem:[#allocation5 + $0x570] sm:$0xff]
    %v235 = vld [vmem:[#allocation5 + $0x578] sm:$0xff]
    %v236 = vld [vmem:[#allocation5 + $0x580] sm:$0xff]
    %v237 = vld [vmem:[#allocation5 + $0x588] sm:$0xff]
    %v238 = vld [vmem:[#allocation5 + $0x590] sm:$0xff]
    %v239 = vld [vmem:[#allocation5 + $0x598] sm:$0xff]
    %v240 = vld [vmem:[#allocation5 + $0x5a0] sm:$0xff]
    %v241 = vld [vmem:[#allocation5 + $0x5a8] sm:$0xff]
    %v242 = vld [vmem:[#allocation5 + $0x5b0] sm:$0xff]
    %v243 = vld [vmem:[#allocation5 + $0x5b8] sm:$0xff]
    %v244 = vld [vmem:[#allocation5 + $0x5c0] sm:$0xff]
    %v245 = vld [vmem:[#allocation5 + $0x5c8] sm:$0xff]
    %v246 = vld [vmem:[#allocation5 + $0x5d0] sm:$0xff]
    %v247 = vld [vmem:[#allocation5 + $0x5d8] sm:$0xff]
    %v248 = vld [vmem:[#allocation5 + $0x5e0] sm:$0xff]
    %v249 = vld [vmem:[#allocation5 + $0x5e8] sm:$0xff]
    %v250 = vld [vmem:[#allocation5 + $0x5f0] sm:$0xff]
    %v251 = vld [vmem:[#allocation5 + $0x5f8] sm:$0xff]
    %v252 = vld [vmem:[#allocation5 + $0x600] sm:$0xff]
    %v253 = vld [vmem:[#allocation5 + $0x608] sm:$0xff]
    %v254 = vld [vmem:[#allocation5 + $0x610] sm:$0xff]
    %v255 = vld [vmem:[#allocation5 + $0x618] sm:$0xff]
    %v256 = vld [vmem:[#allocation7] sm:$0xff]
    %v257 = vld [vmem:[#allocation7 + $0x8] sm:$0xff]
    %v258 = vld [vmem:[#allocation7 + $0x10] sm:$0xff]
    %v259 = vld [vmem:[#allocation7 + $0x18] sm:$0xff]
    %v260 = vld [vmem:[#allocation7 + $0x20] sm:$0xff]
    %v261 = vld [vmem:[#allocation7 + $0x28] sm:$0xff]
    %v262 = vld [vmem:[#allocation7 + $0x30] sm:$0xff]
    %v263 = vld [vmem:[#allocation7 + $0x38] sm:$0xff]
    %v264 = vld [vmem:[#allocation7 + $0x40] sm:$0xff]
    %v265 = vld [vmem:[#allocation7 + $0x48] sm:$0xff]
    %v266 = vld [vmem:[#allocation7 + $0x50] sm:$0xff]
    %v267 = vld [vmem:[#allocation7 + $0x58] sm:$0xff]
    %v268 = vld [vmem:[#allocation7 + $0x60] sm:$0x3]
    %v282 = vperm.slane %v256, 0
    %v283 = vperm.slane %v256, 1
    %v284 = vperm.slane %v256, 2
    %v285 = vperm.slane %v256, 3
    %v286 = vperm.slane %v256, 4
    %v287 = vperm.slane %v256, 5
    %v288 = vperm.slane %v256, 6
    %v289 = vperm.slane %v256, 7
    %v290 = vperm.slane %v257, 0
    %v291 = vperm.slane %v257, 1
    %v292 = vperm.slane %v257, 2
    %v293 = vperm.slane %v257, 3
    %v294 = vperm.slane %v257, 4
    %v295 = vperm.slane %v257, 5
    %v296 = vperm.slane %v257, 6
    %v297 = vperm.slane %v257, 7
    %v298 = vperm.slane %v258, 0
    %v299 = vperm.slane %v258, 1
    %v300 = vperm.slane %v258, 2
    %v301 = vperm.slane %v258, 3
    %v302 = vperm.slane %v258, 4
    %v303 = vperm.slane %v258, 5
    %v304 = vperm.slane %v258, 6
    %v305 = vperm.slane %v258, 7
    %v306 = vperm.slane %v259, 0
    %v307 = vperm.slane %v259, 1
    %v308 = vperm.slane %v259, 2
    %v309 = vperm.slane %v259, 3
    %v310 = vperm.slane %v259, 4
    %v311 = vperm.slane %v259, 5
    %v312 = vperm.slane %v259, 6
    %v313 = vperm.slane %v259, 7
    %v314 = vperm.slane %v260, 0
    %v315 = vperm.slane %v260, 1
    %v316 = vperm.slane %v260, 2
    %v317 = vperm.slane %v260, 3
    %v318 = vperm.slane %v260, 4
    %v319 = vperm.slane %v260, 5
    %v320 = vperm.slane %v260, 6
    %v321 = vperm.slane %v260, 7
    %v322 = vperm.slane %v261, 0
    %v323 = vperm.slane %v261, 1
    %v324 = vperm.slane %v261, 2
    %v325 = vperm.slane %v261, 3
    %v326 = vperm.slane %v261, 4
    %v327 = vperm.slane %v261, 5
    %v328 = vperm.slane %v261, 6
    %v329 = vperm.slane %v261, 7
    %v330 = vperm.slane %v262, 0
    %v331 = vperm.slane %v262, 1
    %v332 = vperm.slane %v262, 2
    %v333 = vperm.slane %v262, 3
    %v334 = vperm.slane %v262, 4
    %v335 = vperm.slane %v262, 5
    %v336 = vperm.slane %v262, 6
    %v337 = vperm.slane %v262, 7
    %v338 = vperm.slane %v263, 0
    %v339 = vperm.slane %v263, 1
    %v340 = vperm.slane %v263, 2
    %v341 = vperm.slane %v263, 3
    %v342 = vperm.slane %v263, 4
    %v343 = vperm.slane %v263, 5
    %v344 = vperm.slane %v263, 6
    %v345 = vperm.slane %v263, 7
    %v346 = vperm.slane %v264, 0
    %v347 = vperm.slane %v264, 1
    %v348 = vperm.slane %v264, 2
    %v349 = vperm.slane %v264, 3
    %v350 = vperm.slane %v264, 4
    %v351 = vperm.slane %v264, 5
    %v352 = vperm.slane %v264, 6
    %v353 = vperm.slane %v264, 7
    %v354 = vperm.slane %v265, 0
    %v355 = vperm.slane %v265, 1
    %v356 = vperm.slane %v265, 2
    %v357 = vperm.slane %v265, 3
    %v358 = vperm.slane %v265, 4
    %v359 = vperm.slane %v265, 5
    %v360 = vperm.slane %v265, 6
    %v361 = vperm.slane %v265, 7
    %v362 = vperm.slane %v266, 0
    %v363 = vperm.slane %v266, 1
    %v364 = vperm.slane %v266, 2
    %v365 = vperm.slane %v266, 3
    %v366 = vperm.slane %v266, 4
    %v367 = vperm.slane %v266, 5
    %v368 = vperm.slane %v266, 6
    %v369 = vperm.slane %v266, 7
    %v370 = vperm.slane %v267, 0
    %v371 = vperm.slane %v267, 1
    %v372 = vperm.slane %v267, 2
    %v373 = vperm.slane %v267, 3
    %v374 = vperm.slane %v267, 4
    %v375 = vperm.slane %v267, 5
    %v376 = vperm.slane %v267, 6
    %v377 = vperm.slane %v267, 7
    %v378 = vperm.slane %v268, 0
    %v379 = vperm.slane %v268, 1
    %v674 = vunpack.c.l.b16 %v60
    %v675 = vunpack.c.h.b16 %v60
    %v676 = vunpack.c.l.b16 %v61
    %v677 = vunpack.c.h.b16 %v61
    %v678 = vunpack.c.l.b16 %v62
    %v679 = vunpack.c.h.b16 %v62
    %v680 = vunpack.c.l.b16 %v63
    %v681 = vunpack.c.h.b16 %v63
    %v682 = vunpack.c.l.b16 %v64
    %v683 = vunpack.c.h.b16 %v64
    %v684 = vunpack.c.l.b16 %v65
    %v685 = vunpack.c.h.b16 %v65
    %v686 = vunpack.c.l.b16 %v66
    %v687 = vunpack.c.h.b16 %v66
    %v688 = vunpack.c.l.b16 %v67
    %v689 = vunpack.c.h.b16 %v67
    %v690 = vunpack.c.l.b16 %v68
    %v691 = vunpack.c.h.b16 %v68
    %v692 = vunpack.c.l.b16 %v69
    %v693 = vunpack.c.h.b16 %v69
    %v694 = vunpack.c.l.b16 %v70
    %v695 = vunpack.c.h.b16 %v70
    %v696 = vunpack.c.l.b16 %v71
    %v697 = vunpack.c.h.b16 %v71
    %v698 = vunpack.c.l.b16 %v72
    %v699 = vunpack.c.h.b16 %v72
    %v700 = vunpack.c.l.b16 %v73
    %v701 = vunpack.c.h.b16 %v73
    %v702 = vunpack.c.l.b16 %v74
    %v703 = vunpack.c.h.b16 %v74
    %v704 = vunpack.c.l.b16 %v75
    %v705 = vunpack.c.h.b16 %v75
    %v706 = vunpack.c.l.b16 %v76
    %v707 = vunpack.c.h.b16 %v76
    %v708 = vunpack.c.l.b16 %v77
    %v709 = vunpack.c.h.b16 %v77
    %v710 = vunpack.c.l.b16 %v78
    %v711 = vunpack.c.h.b16 %v78
    %v712 = vunpack.c.l.b16 %v79
    %v713 = vunpack.c.h.b16 %v79
    %v714 = vunpack.c.l.b16 %v80
    %v715 = vunpack.c.h.b16 %v80
    %v716 = vunpack.c.l.b16 %v81
    %v717 = vunpack.c.h.b16 %v81
    %v718 = vunpack.c.l.b16 %v82
    %v719 = vunpack.c.h.b16 %v82
    %v720 = vunpack.c.l.b16 %v83
    %v721 = vunpack.c.h.b16 %v83
    %v722 = vunpack.c.l.b16 %v84
    %v723 = vunpack.c.h.b16 %v84
    %v724 = vunpack.c.l.b16 %v85
    %v725 = vunpack.c.h.b16 %v85
    %v726 = vunpack.c.l.b16 %v86
    %v727 = vunpack.c.h.b16 %v86
    %v728 = vunpack.c.l.b16 %v87
    %v729 = vunpack.c.h.b16 %v87
    %v730 = vunpack.c.l.b16 %v88
    %v731 = vunpack.c.h.b16 %v88
    %v732 = vunpack.c.l.b16 %v89
    %v733 = vunpack.c.h.b16 %v89
    %v734 = vunpack.c.l.b16 %v90
    %v735 = vunpack.c.h.b16 %v90
    %v736 = vunpack.c.l.b16 %v91
    %v737 = vunpack.c.h.b16 %v91
    %v738 = vunpack.c.l.b16 %v92
    %v739 = vunpack.c.h.b16 %v92
    %v740 = vunpack.c.l.b16 %v93
    %v741 = vunpack.c.h.b16 %v93
    %v742 = vunpack.c.l.b16 %v94
    %v743 = vunpack.c.h.b16 %v94
    %v744 = vunpack.c.l.b16 %v95
    %v745 = vunpack.c.h.b16 %v95
    %v746 = vunpack.c.l.b16 %v96
    %v747 = vunpack.c.h.b16 %v96
    %v748 = vunpack.c.l.b16 %v97
    %v749 = vunpack.c.h.b16 %v97
    %v750 = vunpack.c.l.b16 %v98
    %v751 = vunpack.c.h.b16 %v98
    %v752 = vunpack.c.l.b16 %v99
    %v753 = vunpack.c.h.b16 %v99
    %v754 = vunpack.c.l.b16 %v100
    %v755 = vunpack.c.h.b16 %v100
    %v756 = vunpack.c.l.b16 %v101
    %v757 = vunpack.c.h.b16 %v101
    %v758 = vunpack.c.l.b16 %v102
    %v759 = vunpack.c.h.b16 %v102
    %v760 = vunpack.c.l.b16 %v103
    %v761 = vunpack.c.h.b16 %v103
    %v762 = vunpack.c.l.b16 %v104
    %v763 = vunpack.c.h.b16 %v104
    %v764 = vunpack.c.l.b16 %v105
    %v765 = vunpack.c.h.b16 %v105
    %v766 = vunpack.c.l.b16 %v106
    %v767 = vunpack.c.h.b16 %v106
    %v768 = vunpack.c.l.b16 %v107
    %v769 = vunpack.c.h.b16 %v107
    %v770 = vunpack.c.l.b16 %v108
    %v771 = vunpack.c.h.b16 %v108
    %v772 = vunpack.c.l.b16 %v109
    %v773 = vunpack.c.h.b16 %v109
    %v774 = vunpack.c.l.b16 %v110
    %v775 = vunpack.c.h.b16 %v110
    %v776 = vunpack.c.l.b16 %v111
    %v777 = vunpack.c.h.b16 %v111
    %v778 = vunpack.c.l.b16 %v112
    %v779 = vunpack.c.h.b16 %v112
    %v780 = vunpack.c.l.b16 %v113
    %v781 = vunpack.c.h.b16 %v113
    %v782 = vunpack.c.l.b16 %v114
    %v783 = vunpack.c.h.b16 %v114
    %v784 = vunpack.c.l.b16 %v115
    %v785 = vunpack.c.h.b16 %v115
    %v786 = vunpack.c.l.b16 %v116
    %v787 = vunpack.c.h.b16 %v116
    %v788 = vunpack.c.l.b16 %v117
    %v789 = vunpack.c.h.b16 %v117
    %v790 = vunpack.c.l.b16 %v118
    %v791 = vunpack.c.h.b16 %v118
    %v792 = vunpack.c.l.b16 %v119
    %v793 = vunpack.c.h.b16 %v119
    %v794 = vunpack.c.l.b16 %v120
    %v795 = vunpack.c.h.b16 %v120
    %v796 = vunpack.c.l.b16 %v121
    %v797 = vunpack.c.h.b16 %v121
    %v798 = vunpack.c.l.b16 %v122
    %v799 = vunpack.c.h.b16 %v122
    %v800 = vunpack.c.l.b16 %v123
    %v801 = vunpack.c.h.b16 %v123
    %v802 = vunpack.c.l.b16 %v124
    %v803 = vunpack.c.h.b16 %v124
    %v804 = vunpack.c.l.b16 %v125
    %v805 = vunpack.c.h.b16 %v125
    %v806 = vunpack.c.l.b16 %v126
    %v807 = vunpack.c.h.b16 %v126
    %v808 = vunpack.c.l.b16 %v127
    %v809 = vunpack.c.h.b16 %v127
    %v810 = vunpack.c.l.b16 %v128
    %v811 = vunpack.c.h.b16 %v128
    %v812 = vunpack.c.l.b16 %v129
    %v813 = vunpack.c.h.b16 %v129
    %v814 = vunpack.c.l.b16 %v130
    %v815 = vunpack.c.h.b16 %v130
    %v816 = vunpack.c.l.b16 %v131
    %v817 = vunpack.c.h.b16 %v131
    %v818 = vunpack.c.l.b16 %v132
    %v819 = vunpack.c.h.b16 %v132
    %v820 = vunpack.c.l.b16 %v133
    %v821 = vunpack.c.h.b16 %v133
    %v822 = vunpack.c.l.b16 %v134
    %v823 = vunpack.c.h.b16 %v134
    %v824 = vunpack.c.l.b16 %v135
    %v825 = vunpack.c.h.b16 %v135
    %v826 = vunpack.c.l.b16 %v136
    %v827 = vunpack.c.h.b16 %v136
    %v828 = vunpack.c.l.b16 %v137
    %v829 = vunpack.c.h.b16 %v137
    %v830 = vunpack.c.l.b16 %v138
    %v831 = vunpack.c.h.b16 %v138
    %v832 = vunpack.c.l.b16 %v139
    %v833 = vunpack.c.h.b16 %v139
    %v834 = vunpack.c.l.b16 %v140
    %v835 = vunpack.c.h.b16 %v140
    %v836 = vunpack.c.l.b16 %v141
    %v837 = vunpack.c.h.b16 %v141
    %v838 = vunpack.c.l.b16 %v142
    %v839 = vunpack.c.h.b16 %v142
    %v840 = vunpack.c.l.b16 %v143
    %v841 = vunpack.c.h.b16 %v143
    %v842 = vunpack.c.l.b16 %v144
    %v843 = vunpack.c.h.b16 %v144
    %v844 = vunpack.c.l.b16 %v145
    %v845 = vunpack.c.h.b16 %v145
    %v846 = vunpack.c.l.b16 %v146
    %v847 = vunpack.c.h.b16 %v146
    %v848 = vunpack.c.l.b16 %v147
    %v849 = vunpack.c.h.b16 %v147
    %v850 = vunpack.c.l.b16 %v148
    %v851 = vunpack.c.h.b16 %v148
    %v852 = vunpack.c.l.b16 %v149
    %v853 = vunpack.c.h.b16 %v149
    %v854 = vunpack.c.l.b16 %v150
    %v855 = vunpack.c.h.b16 %v150
    %v856 = vunpack.c.l.b16 %v151
    %v857 = vunpack.c.h.b16 %v151
    %v858 = vunpack.c.l.b16 %v152
    %v859 = vunpack.c.h.b16 %v152
    %v860 = vunpack.c.l.b16 %v153
    %v861 = vunpack.c.h.b16 %v153
    %v862 = vunpack.c.l.b16 %v154
    %v863 = vunpack.c.h.b16 %v154
    %v864 = vunpack.c.l.b16 %v155
    %v865 = vunpack.c.h.b16 %v155
    %v866 = vunpack.c.l.b16 %v156
    %v867 = vunpack.c.h.b16 %v156
    %v868 = vunpack.c.l.b16 %v157
    %v869 = vunpack.c.h.b16 %v157
    %v870 = vunpack.c.l.b16 %v158
    %v871 = vunpack.c.h.b16 %v158
    %v872 = vunpack.c.l.b16 %v159
    %v873 = vunpack.c.h.b16 %v159
    %v874 = vunpack.c.l.b16 %v160
    %v875 = vunpack.c.h.b16 %v160
    %v876 = vunpack.c.l.b16 %v161
    %v877 = vunpack.c.h.b16 %v161
    %v878 = vunpack.c.l.b16 %v162
    %v879 = vunpack.c.h.b16 %v162
    %v880 = vunpack.c.l.b16 %v163
    %v881 = vunpack.c.h.b16 %v163
    %v882 = vunpack.c.l.b16 %v164
    %v883 = vunpack.c.h.b16 %v164
    %v884 = vunpack.c.l.b16 %v165
    %v885 = vunpack.c.h.b16 %v165
    %v886 = vunpack.c.l.b16 %v166
    %v887 = vunpack.c.h.b16 %v166
    %v888 = vunpack.c.l.b16 %v167
    %v889 = vunpack.c.h.b16 %v167
    %v890 = vunpack.c.l.b16 %v168
    %v891 = vunpack.c.h.b16 %v168
    %v892 = vunpack.c.l.b16 %v169
    %v893 = vunpack.c.h.b16 %v169
    %v894 = vunpack.c.l.b16 %v170
    %v895 = vunpack.c.h.b16 %v170
    %v896 = vunpack.c.l.b16 %v171
    %v897 = vunpack.c.h.b16 %v171
    %v898 = vunpack.c.l.b16 %v172
    %v899 = vunpack.c.h.b16 %v172
    %v900 = vunpack.c.l.b16 %v173
    %v901 = vunpack.c.h.b16 %v173
    %v902 = vunpack.c.l.b16 %v174
    %v903 = vunpack.c.h.b16 %v174
    %v904 = vunpack.c.l.b16 %v175
    %v905 = vunpack.c.h.b16 %v175
    %v906 = vunpack.c.l.b16 %v176
    %v907 = vunpack.c.h.b16 %v176
    %v908 = vunpack.c.l.b16 %v177
    %v909 = vunpack.c.h.b16 %v177
    %v910 = vunpack.c.l.b16 %v178
    %v911 = vunpack.c.h.b16 %v178
    %v912 = vunpack.c.l.b16 %v179
    %v913 = vunpack.c.h.b16 %v179
    %v914 = vunpack.c.l.b16 %v180
    %v915 = vunpack.c.h.b16 %v180
    %v916 = vunpack.c.l.b16 %v181
    %v917 = vunpack.c.h.b16 %v181
    %v918 = vunpack.c.l.b16 %v182
    %v919 = vunpack.c.h.b16 %v182
    %v920 = vunpack.c.l.b16 %v183
    %v921 = vunpack.c.h.b16 %v183
    %v922 = vunpack.c.l.b16 %v184
    %v923 = vunpack.c.h.b16 %v184
    %v924 = vunpack.c.l.b16 %v185
    %v925 = vunpack.c.h.b16 %v185
    %v926 = vunpack.c.l.b16 %v186
    %v927 = vunpack.c.h.b16 %v186
    %v928 = vunpack.c.l.b16 %v187
    %v929 = vunpack.c.h.b16 %v187
    %v930 = vunpack.c.l.b16 %v188
    %v931 = vunpack.c.h.b16 %v188
    %v932 = vunpack.c.l.b16 %v189
    %v933 = vunpack.c.h.b16 %v189
    %v934 = vunpack.c.l.b16 %v190
    %v935 = vunpack.c.h.b16 %v190
    %v936 = vunpack.c.l.b16 %v191
    %v937 = vunpack.c.h.b16 %v191
    %v938 = vunpack.c.l.b16 %v192
    %v939 = vunpack.c.h.b16 %v192
    %v940 = vunpack.c.l.b16 %v193
    %v941 = vunpack.c.h.b16 %v193
    %v942 = vunpack.c.l.b16 %v194
    %v943 = vunpack.c.h.b16 %v194
    %v944 = vunpack.c.l.b16 %v195
    %v945 = vunpack.c.h.b16 %v195
    %v946 = vunpack.c.l.b16 %v196
    %v947 = vunpack.c.h.b16 %v196
    %v948 = vunpack.c.l.b16 %v197
    %v949 = vunpack.c.h.b16 %v197
    %v950 = vunpack.c.l.b16 %v198
    %v951 = vunpack.c.h.b16 %v198
    %v952 = vunpack.c.l.b16 %v199
    %v953 = vunpack.c.h.b16 %v199
    %v954 = vunpack.c.l.b16 %v200
    %v955 = vunpack.c.h.b16 %v200
    %v956 = vunpack.c.l.b16 %v201
    %v957 = vunpack.c.h.b16 %v201
    %v958 = vunpack.c.l.b16 %v202
    %v959 = vunpack.c.h.b16 %v202
    %v960 = vunpack.c.l.b16 %v203
    %v961 = vunpack.c.h.b16 %v203
    %v962 = vunpack.c.l.b16 %v204
    %v963 = vunpack.c.h.b16 %v204
    %v964 = vunpack.c.l.b16 %v205
    %v965 = vunpack.c.h.b16 %v205
    %v966 = vunpack.c.l.b16 %v206
    %v967 = vunpack.c.h.b16 %v206
    %v968 = vunpack.c.l.b16 %v207
    %v969 = vunpack.c.h.b16 %v207
    %v970 = vunpack.c.l.b16 %v208
    %v971 = vunpack.c.h.b16 %v208
    %v972 = vunpack.c.l.b16 %v209
    %v973 = vunpack.c.h.b16 %v209
    %v974 = vunpack.c.l.b16 %v210
    %v975 = vunpack.c.h.b16 %v210
    %v976 = vunpack.c.l.b16 %v211
    %v977 = vunpack.c.h.b16 %v211
    %v978 = vunpack.c.l.b16 %v212
    %v979 = vunpack.c.h.b16 %v212
    %v980 = vunpack.c.l.b16 %v213
    %v981 = vunpack.c.h.b16 %v213
    %v982 = vunpack.c.l.b16 %v214
    %v983 = vunpack.c.h.b16 %v214
    %v984 = vunpack.c.l.b16 %v215
    %v985 = vunpack.c.h.b16 %v215
    %v986 = vunpack.c.l.b16 %v216
    %v987 = vunpack.c.h.b16 %v216
    %v988 = vunpack.c.l.b16 %v217
    %v989 = vunpack.c.h.b16 %v217
    %v990 = vunpack.c.l.b16 %v218
    %v991 = vunpack.c.h.b16 %v218
    %v992 = vunpack.c.l.b16 %v219
    %v993 = vunpack.c.h.b16 %v219
    %v994 = vunpack.c.l.b16 %v220
    %v995 = vunpack.c.h.b16 %v220
    %v996 = vunpack.c.l.b16 %v221
    %v997 = vunpack.c.h.b16 %v221
    %v998 = vunpack.c.l.b16 %v222
    %v999 = vunpack.c.h.b16 %v222
    %v1000 = vunpack.c.l.b16 %v223
    %v1001 = vunpack.c.h.b16 %v223
    %v1002 = vunpack.c.l.b16 %v224
    %v1003 = vunpack.c.h.b16 %v224
    %v1004 = vunpack.c.l.b16 %v225
    %v1005 = vunpack.c.h.b16 %v225
    %v1006 = vunpack.c.l.b16 %v226
    %v1007 = vunpack.c.h.b16 %v226
    %v1008 = vunpack.c.l.b16 %v227
    %v1009 = vunpack.c.h.b16 %v227
    %v1010 = vunpack.c.l.b16 %v228
    %v1011 = vunpack.c.h.b16 %v228
    %v1012 = vunpack.c.l.b16 %v229
    %v1013 = vunpack.c.h.b16 %v229
    %v1014 = vunpack.c.l.b16 %v230
    %v1015 = vunpack.c.h.b16 %v230
    %v1016 = vunpack.c.l.b16 %v231
    %v1017 = vunpack.c.h.b16 %v231
    %v1018 = vunpack.c.l.b16 %v232
    %v1019 = vunpack.c.h.b16 %v232
    %v1020 = vunpack.c.l.b16 %v233
    %v1021 = vunpack.c.h.b16 %v233
    %v1022 = vunpack.c.l.b16 %v234
    %v1023 = vunpack.c.h.b16 %v234
    %v1024 = vunpack.c.l.b16 %v235
    %v1025 = vunpack.c.h.b16 %v235
    %v1026 = vunpack.c.l.b16 %v236
    %v1027 = vunpack.c.h.b16 %v236
    %v1028 = vunpack.c.l.b16 %v237
    %v1029 = vunpack.c.h.b16 %v237
    %v1030 = vunpack.c.l.b16 %v238
    %v1031 = vunpack.c.h.b16 %v238
    %v1032 = vunpack.c.l.b16 %v239
    %v1033 = vunpack.c.h.b16 %v239
    %v1034 = vunpack.c.l.b16 %v240
    %v1035 = vunpack.c.h.b16 %v240
    %v1036 = vunpack.c.l.b16 %v241
    %v1037 = vunpack.c.h.b16 %v241
    %v1038 = vunpack.c.l.b16 %v242
    %v1039 = vunpack.c.h.b16 %v242
    %v1040 = vunpack.c.l.b16 %v243
    %v1041 = vunpack.c.h.b16 %v243
    %v1042 = vunpack.c.l.b16 %v244
    %v1043 = vunpack.c.h.b16 %v244
    %v1044 = vunpack.c.l.b16 %v245
    %v1045 = vunpack.c.h.b16 %v245
    %v1046 = vunpack.c.l.b16 %v246
    %v1047 = vunpack.c.h.b16 %v246
    %v1048 = vunpack.c.l.b16 %v247
    %v1049 = vunpack.c.h.b16 %v247
    %v1050 = vunpack.c.l.b16 %v248
    %v1051 = vunpack.c.h.b16 %v248
    %v1052 = vunpack.c.l.b16 %v249
    %v1053 = vunpack.c.h.b16 %v249
    %v1054 = vunpack.c.l.b16 %v250
    %v1055 = vunpack.c.h.b16 %v250
    %v1056 = vunpack.c.l.b16 %v251
    %v1057 = vunpack.c.h.b16 %v251
    %v1058 = vunpack.c.l.b16 %v252
    %v1059 = vunpack.c.h.b16 %v252
    %v1060 = vunpack.c.l.b16 %v253
    %v1061 = vunpack.c.h.b16 %v253
    %v1062 = vunpack.c.l.b16 %v254
    %v1063 = vunpack.c.h.b16 %v254
    %v1064 = vunpack.c.l.b16 %v255
    %v1065 = vunpack.c.h.b16 %v255
    %v1066 = vpack.c.b16 %v772, %v674
    %v1067 = vpack.c.b16 %v773, %v675
    %v1068 = vpack.c.b16 %v774, %v676
    %v1069 = vpack.c.b16 %v775, %v677
    %v1070 = vpack.c.b16 %v776, %v678
    %v1071 = vpack.c.b16 %v777, %v679
    %v1072 = vpack.c.b16 %v778, %v680
    %v1073 = vpack.c.b16 %v779, %v681
    %v1074 = vpack.c.b16 %v780, %v682
    %v1075 = vpack.c.b16 %v781, %v683
    %v1076 = vpack.c.b16 %v782, %v684
    %v1077 = vpack.c.b16 %v783, %v685
    %v1078 = vpack.c.b16 %v784, %v686
    %v1079 = vpack.c.b16 %v785, %v687
    %v1080 = vpack.c.b16 %v786, %v688
    %v1081 = vpack.c.b16 %v787, %v689
    %v1082 = vpack.c.b16 %v788, %v690
    %v1083 = vpack.c.b16 %v789, %v691
    %v1084 = vpack.c.b16 %v790, %v692
    %v1085 = vpack.c.b16 %v791, %v693
    %v1086 = vpack.c.b16 %v792, %v694
    %v1087 = vpack.c.b16 %v793, %v695
    %v1088 = vpack.c.b16 %v794, %v696
    %v1089 = vpack.c.b16 %v795, %v697
    %v1090 = vpack.c.b16 %v796, %v698
    %v1091 = vpack.c.b16 %v797, %v699
    %v1092 = vpack.c.b16 %v798, %v700
    %v1093 = vpack.c.b16 %v799, %v701
    %v1094 = vpack.c.b16 %v800, %v702
    %v1095 = vpack.c.b16 %v801, %v703
    %v1096 = vpack.c.b16 %v802, %v704
    %v1097 = vpack.c.b16 %v803, %v705
    %v1098 = vpack.c.b16 %v804, %v706
    %v1099 = vpack.c.b16 %v805, %v707
    %v1100 = vpack.c.b16 %v806, %v708
    %v1101 = vpack.c.b16 %v807, %v709
    %v1102 = vpack.c.b16 %v808, %v710
    %v1103 = vpack.c.b16 %v809, %v711
    %v1104 = vpack.c.b16 %v810, %v712
    %v1105 = vpack.c.b16 %v811, %v713
    %v1106 = vpack.c.b16 %v812, %v714
    %v1107 = vpack.c.b16 %v813, %v715
    %v1108 = vpack.c.b16 %v814, %v716
    %v1109 = vpack.c.b16 %v815, %v717
    %v1110 = vpack.c.b16 %v816, %v718
    %v1111 = vpack.c.b16 %v817, %v719
    %v1112 = vpack.c.b16 %v818, %v720
    %v1113 = vpack.c.b16 %v819, %v721
    %v1114 = vpack.c.b16 %v820, %v722
    %v1115 = vpack.c.b16 %v821, %v723
    %v1116 = vpack.c.b16 %v822, %v724
    %v1117 = vpack.c.b16 %v823, %v725
    %v1118 = vpack.c.b16 %v824, %v726
    %v1119 = vpack.c.b16 %v825, %v727
    %v1120 = vpack.c.b16 %v826, %v728
    %v1121 = vpack.c.b16 %v827, %v729
    %v1122 = vpack.c.b16 %v828, %v730
    %v1123 = vpack.c.b16 %v829, %v731
    %v1124 = vpack.c.b16 %v830, %v732
    %v1125 = vpack.c.b16 %v831, %v733
    %v1126 = vpack.c.b16 %v832, %v734
    %v1127 = vpack.c.b16 %v833, %v735
    %v1128 = vpack.c.b16 %v834, %v736
    %v1129 = vpack.c.b16 %v835, %v737
    %v1130 = vpack.c.b16 %v836, %v738
    %v1131 = vpack.c.b16 %v837, %v739
    %v1132 = vpack.c.b16 %v838, %v740
    %v1133 = vpack.c.b16 %v839, %v741
    %v1134 = vpack.c.b16 %v840, %v742
    %v1135 = vpack.c.b16 %v841, %v743
    %v1136 = vpack.c.b16 %v842, %v744
    %v1137 = vpack.c.b16 %v843, %v745
    %v1138 = vpack.c.b16 %v844, %v746
    %v1139 = vpack.c.b16 %v845, %v747
    %v1140 = vpack.c.b16 %v846, %v748
    %v1141 = vpack.c.b16 %v847, %v749
    %v1142 = vpack.c.b16 %v848, %v750
    %v1143 = vpack.c.b16 %v849, %v751
    %v1144 = vpack.c.b16 %v850, %v752
    %v1145 = vpack.c.b16 %v851, %v753
    %v1146 = vpack.c.b16 %v852, %v754
    %v1147 = vpack.c.b16 %v853, %v755
    %v1148 = vpack.c.b16 %v854, %v756
    %v1149 = vpack.c.b16 %v855, %v757
    %v1150 = vpack.c.b16 %v856, %v758
    %v1151 = vpack.c.b16 %v857, %v759
    %v1152 = vpack.c.b16 %v858, %v760
    %v1153 = vpack.c.b16 %v859, %v761
    %v1154 = vpack.c.b16 %v860, %v762
    %v1155 = vpack.c.b16 %v861, %v763
    %v1156 = vpack.c.b16 %v862, %v764
    %v1157 = vpack.c.b16 %v863, %v765
    %v1158 = vpack.c.b16 %v864, %v766
    %v1159 = vpack.c.b16 %v865, %v767
    %v1160 = vpack.c.b16 %v866, %v768
    %v1161 = vpack.c.b16 %v867, %v769
    %v1162 = vpack.c.b16 %v868, %v770
    %v1163 = vpack.c.b16 %v869, %v771
    %v1164 = vpack.c.b16 %v968, %v870
    %v1165 = vpack.c.b16 %v969, %v871
    %v1166 = vpack.c.b16 %v970, %v872
    %v1167 = vpack.c.b16 %v971, %v873
    %v1168 = vpack.c.b16 %v972, %v874
    %v1169 = vpack.c.b16 %v973, %v875
    %v1170 = vpack.c.b16 %v974, %v876
    %v1171 = vpack.c.b16 %v975, %v877
    %v1172 = vpack.c.b16 %v976, %v878
    %v1173 = vpack.c.b16 %v977, %v879
    %v1174 = vpack.c.b16 %v978, %v880
    %v1175 = vpack.c.b16 %v979, %v881
    %v1176 = vpack.c.b16 %v980, %v882
    %v1177 = vpack.c.b16 %v981, %v883
    %v1178 = vpack.c.b16 %v982, %v884
    %v1179 = vpack.c.b16 %v983, %v885
    %v1180 = vpack.c.b16 %v984, %v886
    %v1181 = vpack.c.b16 %v985, %v887
    %v1182 = vpack.c.b16 %v986, %v888
    %v1183 = vpack.c.b16 %v987, %v889
    %v1184 = vpack.c.b16 %v988, %v890
    %v1185 = vpack.c.b16 %v989, %v891
    %v1186 = vpack.c.b16 %v990, %v892
    %v1187 = vpack.c.b16 %v991, %v893
    %v1188 = vpack.c.b16 %v992, %v894
    %v1189 = vpack.c.b16 %v993, %v895
    %v1190 = vpack.c.b16 %v994, %v896
    %v1191 = vpack.c.b16 %v995, %v897
    %v1192 = vpack.c.b16 %v996, %v898
    %v1193 = vpack.c.b16 %v997, %v899
    %v1194 = vpack.c.b16 %v998, %v900
    %v1195 = vpack.c.b16 %v999, %v901
    %v1196 = vpack.c.b16 %v1000, %v902
    %v1197 = vpack.c.b16 %v1001, %v903
    %v1198 = vpack.c.b16 %v1002, %v904
    %v1199 = vpack.c.b16 %v1003, %v905
    %v1200 = vpack.c.b16 %v1004, %v906
    %v1201 = vpack.c.b16 %v1005, %v907
    %v1202 = vpack.c.b16 %v1006, %v908
    %v1203 = vpack.c.b16 %v1007, %v909
    %v1204 = vpack.c.b16 %v1008, %v910
    %v1205 = vpack.c.b16 %v1009, %v911
    %v1206 = vpack.c.b16 %v1010, %v912
    %v1207 = vpack.c.b16 %v1011, %v913
    %v1208 = vpack.c.b16 %v1012, %v914
    %v1209 = vpack.c.b16 %v1013, %v915
    %v1210 = vpack.c.b16 %v1014, %v916
    %v1211 = vpack.c.b16 %v1015, %v917
    %v1212 = vpack.c.b16 %v1016, %v918
    %v1213 = vpack.c.b16 %v1017, %v919
    %v1214 = vpack.c.b16 %v1018, %v920
    %v1215 = vpack.c.b16 %v1019, %v921
    %v1216 = vpack.c.b16 %v1020, %v922
    %v1217 = vpack.c.b16 %v1021, %v923
    %v1218 = vpack.c.b16 %v1022, %v924
    %v1219 = vpack.c.b16 %v1023, %v925
    %v1220 = vpack.c.b16 %v1024, %v926
    %v1221 = vpack.c.b16 %v1025, %v927
    %v1222 = vpack.c.b16 %v1026, %v928
    %v1223 = vpack.c.b16 %v1027, %v929
    %v1224 = vpack.c.b16 %v1028, %v930
    %v1225 = vpack.c.b16 %v1029, %v931
    %v1226 = vpack.c.b16 %v1030, %v932
    %v1227 = vpack.c.b16 %v1031, %v933
    %v1228 = vpack.c.b16 %v1032, %v934
    %v1229 = vpack.c.b16 %v1033, %v935
    %v1230 = vpack.c.b16 %v1034, %v936
    %v1231 = vpack.c.b16 %v1035, %v937
    %v1232 = vpack.c.b16 %v1036, %v938
    %v1233 = vpack.c.b16 %v1037, %v939
    %v1234 = vpack.c.b16 %v1038, %v940
    %v1235 = vpack.c.b16 %v1039, %v941
    %v1236 = vpack.c.b16 %v1040, %v942
    %v1237 = vpack.c.b16 %v1041, %v943
    %v1238 = vpack.c.b16 %v1042, %v944
    %v1239 = vpack.c.b16 %v1043, %v945
    %v1240 = vpack.c.b16 %v1044, %v946
    %v1241 = vpack.c.b16 %v1045, %v947
    %v1242 = vpack.c.b16 %v1046, %v948
    %v1243 = vpack.c.b16 %v1047, %v949
    %v1244 = vpack.c.b16 %v1048, %v950
    %v1245 = vpack.c.b16 %v1049, %v951
    %v1246 = vpack.c.b16 %v1050, %v952
    %v1247 = vpack.c.b16 %v1051, %v953
    %v1248 = vpack.c.b16 %v1052, %v954
    %v1249 = vpack.c.b16 %v1053, %v955
    %v1250 = vpack.c.b16 %v1054, %v956
    %v1251 = vpack.c.b16 %v1055, %v957
    %v1252 = vpack.c.b16 %v1056, %v958
    %v1253 = vpack.c.b16 %v1057, %v959
    %v1254 = vpack.c.b16 %v1058, %v960
    %v1255 = vpack.c.b16 %v1059, %v961
    %v1256 = vpack.c.b16 %v1060, %v962
    %v1257 = vpack.c.b16 %v1061, %v963
    %v1258 = vpack.c.b16 %v1062, %v964
    %v1259 = vpack.c.b16 %v1063, %v965
    %v1260 = vpack.c.b16 %v1064, %v966
    %v1261 = vpack.c.b16 %v1065, %v967
    %vm1458 = vcmask 261120
    %v1460 = vsel %vm1458, %v59, 0
    %1462 = vmatpush.bf16.msra.mxu0 0
    %1463 = vmatpush.bf16.msra.mxu0 0
    %1464 = vmatpush.bf16.msra.mxu0 0
    %1465 = vmatpush.bf16.msra.mxu0 0
    %1466 = vmatpush.bf16.msra.mxu0 0
    %1467 = vmatpush.bf16.msra.mxu0 0
    %1468 = vmatpush.bf16.msra.mxu0 %v1164
    %1469 = vmatpush.bf16.msra.mxu0 %v1066
    %1470 = vmatmul.bf16.gmra.mxu0 %v1460
    %v1471 = vpop.f32.mrf.mxu0
    %v1472 = vadd.f32 %v282, %v1471
    %v1473 = vpop.f32.mrf.mxu0
    %1474 = vdwg.mxu0
    %1475 = vmatpush.bf16.msra.mxu0 0
    %1476 = vmatpush.bf16.msra.mxu0 0
    %1477 = vmatpush.bf16.msra.mxu0 0
    %1478 = vmatpush.bf16.msra.mxu0 0
    %1479 = vmatpush.bf16.msra.mxu0 0
    %1480 = vmatpush.bf16.msra.mxu0 0
    %1481 = vmatpush.bf16.msra.mxu0 %v1165
    %1482 = vmatpush.bf16.msra.mxu0 %v1067
    %1483 = vmatmul.bf16.gmra.mxu0 %v1460
    %v1484 = vpop.f32.mrf.mxu0
    %v1485 = vadd.f32 %v283, %v1484
    %v1486 = vpop.f32.mrf.mxu0
    %1487 = vdwg.mxu0
    %1488 = vmatpush.bf16.msra.mxu0 0
    %1489 = vmatpush.bf16.msra.mxu0 0
    %1490 = vmatpush.bf16.msra.mxu0 0
    %1491 = vmatpush.bf16.msra.mxu0 0
    %1492 = vmatpush.bf16.msra.mxu0 0
    %1493 = vmatpush.bf16.msra.mxu0 0
    %1494 = vmatpush.bf16.msra.mxu0 %v1166
    %1495 = vmatpush.bf16.msra.mxu0 %v1068
    %1496 = vmatmul.bf16.gmra.mxu0 %v1460
    %v1497 = vpop.f32.mrf.mxu0
    %v1498 = vadd.f32 %v284, %v1497
    %v1499 = vpop.f32.mrf.mxu0
    %1500 = vdwg.mxu0
    %1501 = vmatpush.bf16.msra.mxu0 0
    %1502 = vmatpush.bf16.msra.mxu0 0
    %1503 = vmatpush.bf16.msra.mxu0 0
    %1504 = vmatpush.bf16.msra.mxu0 0
    %1505 = vmatpush.bf16.msra.mxu0 0
    %1506 = vmatpush.bf16.msra.mxu0 0
    %1507 = vmatpush.bf16.msra.mxu0 %v1167
    %1508 = vmatpush.bf16.msra.mxu0 %v1069
    %1509 = vmatmul.bf16.gmra.mxu0 %v1460
    %v1510 = vpop.f32.mrf.mxu0
    %v1511 = vadd.f32 %v285, %v1510
    %v1512 = vpop.f32.mrf.mxu0
    %1513 = vdwg.mxu0
    %1514 = vmatpush.bf16.msra.mxu0 0
    %1515 = vmatpush.bf16.msra.mxu0 0
    %1516 = vmatpush.bf16.msra.mxu0 0
    %1517 = vmatpush.bf16.msra.mxu0 0
    %1518 = vmatpush.bf16.msra.mxu0 0
    %1519 = vmatpush.bf16.msra.mxu0 0
    %1520 = vmatpush.bf16.msra.mxu0 %v1168
    %1521 = vmatpush.bf16.msra.mxu0 %v1070
    %1522 = vmatmul.bf16.gmra.mxu0 %v1460
    %v1523 = vpop.f32.mrf.mxu0
    %v1524 = vadd.f32 %v286, %v1523
    %v1525 = vpop.f32.mrf.mxu0
    %1526 = vdwg.mxu0
    %1527 = vmatpush.bf16.msra.mxu0 0
    %1528 = vmatpush.bf16.msra.mxu0 0
    %1529 = vmatpush.bf16.msra.mxu0 0
    %1530 = vmatpush.bf16.msra.mxu0 0
    %1531 = vmatpush.bf16.msra.mxu0 0
    %1532 = vmatpush.bf16.msra.mxu0 0
    %1533 = vmatpush.bf16.msra.mxu0 %v1169
    %1534 = vmatpush.bf16.msra.mxu0 %v1071
    %1535 = vmatmul.bf16.gmra.mxu0 %v1460
    %v1536 = vpop.f32.mrf.mxu0
    %v1537 = vadd.f32 %v287, %v1536
    %v1538 = vpop.f32.mrf.mxu0
    %1539 = vdwg.mxu0
    %1540 = vmatpush.bf16.msra.mxu0 0
    %1541 = vmatpush.bf16.msra.mxu0 0
    %1542 = vmatpush.bf16.msra.mxu0 0
    %1543 = vmatpush.bf16.msra.mxu0 0
    %1544 = vmatpush.bf16.msra.mxu0 0
    %1545 = vmatpush.bf16.msra.mxu0 0
    %1546 = vmatpush.bf16.msra.mxu0 %v1170
    %1547 = vmatpush.bf16.msra.mxu0 %v1072
    %1548 = vmatmul.bf16.gmra.mxu0 %v1460
    %v1549 = vpop.f32.mrf.mxu0
    %v1550 = vadd.f32 %v288, %v1549
    %v1551 = vpop.f32.mrf.mxu0
    %1552 = vdwg.mxu0
    %1553 = vmatpush.bf16.msra.mxu0 0
    %1554 = vmatpush.bf16.msra.mxu0 0
    %1555 = vmatpush.bf16.msra.mxu0 0
    %1556 = vmatpush.bf16.msra.mxu0 0
    %1557 = vmatpush.bf16.msra.mxu0 0
    %1558 = vmatpush.bf16.msra.mxu0 0
    %1559 = vmatpush.bf16.msra.mxu0 %v1171
    %1560 = vmatpush.bf16.msra.mxu0 %v1073
    %1561 = vmatmul.bf16.gmra.mxu0 %v1460
    %v1562 = vpop.f32.mrf.mxu0
    %v1563 = vadd.f32 %v289, %v1562
    %v1564 = vpop.f32.mrf.mxu0
    %1565 = vdwg.mxu0
    %1566 = vmatpush.bf16.msra.mxu0 0
    %1567 = vmatpush.bf16.msra.mxu0 0
    %1568 = vmatpush.bf16.msra.mxu0 0
    %1569 = vmatpush.bf16.msra.mxu0 0
    %1570 = vmatpush.bf16.msra.mxu0 0
    %1571 = vmatpush.bf16.msra.mxu0 0
    %1572 = vmatpush.bf16.msra.mxu0 %v1172
    %1573 = vmatpush.bf16.msra.mxu0 %v1074
    %1574 = vmatmul.bf16.gmra.mxu0 %v1460
    %v1575 = vpop.f32.mrf.mxu0
    %v1576 = vadd.f32 %v290, %v1575
    %v1577 = vpop.f32.mrf.mxu0
    %1578 = vdwg.mxu0
    %1579 = vmatpush.bf16.msra.mxu0 0
    %1580 = vmatpush.bf16.msra.mxu0 0
    %1581 = vmatpush.bf16.msra.mxu0 0
    %1582 = vmatpush.bf16.msra.mxu0 0
    %1583 = vmatpush.bf16.msra.mxu0 0
    %1584 = vmatpush.bf16.msra.mxu0 0
    %1585 = vmatpush.bf16.msra.mxu0 %v1173
    %1586 = vmatpush.bf16.msra.mxu0 %v1075
    %1587 = vmatmul.bf16.gmra.mxu0 %v1460
    %v1588 = vpop.f32.mrf.mxu0
    %v1589 = vadd.f32 %v291, %v1588
    %v1590 = vpop.f32.mrf.mxu0
    %1591 = vdwg.mxu0
    %1592 = vmatpush.bf16.msra.mxu0 0
    %1593 = vmatpush.bf16.msra.mxu0 0
    %1594 = vmatpush.bf16.msra.mxu0 0
    %1595 = vmatpush.bf16.msra.mxu0 0
    %1596 = vmatpush.bf16.msra.mxu0 0
    %1597 = vmatpush.bf16.msra.mxu0 0
    %1598 = vmatpush.bf16.msra.mxu0 %v1174
    %1599 = vmatpush.bf16.msra.mxu0 %v1076
    %1600 = vmatmul.bf16.gmra.mxu0 %v1460
    %v1601 = vpop.f32.mrf.mxu0
    %v1602 = vadd.f32 %v292, %v1601
    %v1603 = vpop.f32.mrf.mxu0
    %1604 = vdwg.mxu0
    %1605 = vmatpush.bf16.msra.mxu0 0
    %1606 = vmatpush.bf16.msra.mxu0 0
    %1607 = vmatpush.bf16.msra.mxu0 0
    %1608 = vmatpush.bf16.msra.mxu0 0
    %1609 = vmatpush.bf16.msra.mxu0 0
    %1610 = vmatpush.bf16.msra.mxu0 0
    %1611 = vmatpush.bf16.msra.mxu0 %v1175
    %1612 = vmatpush.bf16.msra.mxu0 %v1077
    %1613 = vmatmul.bf16.gmra.mxu0 %v1460
    %v1614 = vpop.f32.mrf.mxu0
    %v1615 = vadd.f32 %v293, %v1614
    %v1616 = vpop.f32.mrf.mxu0
    %1617 = vdwg.mxu0
    %1618 = vmatpush.bf16.msra.mxu0 0
    %1619 = vmatpush.bf16.msra.mxu0 0
    %1620 = vmatpush.bf16.msra.mxu0 0
    %1621 = vmatpush.bf16.msra.mxu0 0
    %1622 = vmatpush.bf16.msra.mxu0 0
    %1623 = vmatpush.bf16.msra.mxu0 0
    %1624 = vmatpush.bf16.msra.mxu0 %v1176
    %1625 = vmatpush.bf16.msra.mxu0 %v1078
    %1626 = vmatmul.bf16.gmra.mxu0 %v1460
    %v1627 = vpop.f32.mrf.mxu0
    %v1628 = vadd.f32 %v294, %v1627
    %v1629 = vpop.f32.mrf.mxu0
    %1630 = vdwg.mxu0
    %1631 = vmatpush.bf16.msra.mxu0 0
    %1632 = vmatpush.bf16.msra.mxu0 0
    %1633 = vmatpush.bf16.msra.mxu0 0
    %1634 = vmatpush.bf16.msra.mxu0 0
    %1635 = vmatpush.bf16.msra.mxu0 0
    %1636 = vmatpush.bf16.msra.mxu0 0
    %1637 = vmatpush.bf16.msra.mxu0 %v1177
    %1638 = vmatpush.bf16.msra.mxu0 %v1079
    %1639 = vmatmul.bf16.gmra.mxu0 %v1460
    %v1640 = vpop.f32.mrf.mxu0
    %v1641 = vadd.f32 %v295, %v1640
    %v1642 = vpop.f32.mrf.mxu0
    %1643 = vdwg.mxu0
    %1644 = vmatpush.bf16.msra.mxu0 0
    %1645 = vmatpush.bf16.msra.mxu0 0
    %1646 = vmatpush.bf16.msra.mxu0 0
    %1647 = vmatpush.bf16.msra.mxu0 0
    %1648 = vmatpush.bf16.msra.mxu0 0
    %1649 = vmatpush.bf16.msra.mxu0 0
    %1650 = vmatpush.bf16.msra.mxu0 %v1178
    %1651 = vmatpush.bf16.msra.mxu0 %v1080
    %1652 = vmatmul.bf16.gmra.mxu0 %v1460
    %v1653 = vpop.f32.mrf.mxu0
    %v1654 = vadd.f32 %v296, %v1653
    %v1655 = vpop.f32.mrf.mxu0
    %1656 = vdwg.mxu0
    %1657 = vmatpush.bf16.msra.mxu0 0
    %1658 = vmatpush.bf16.msra.mxu0 0
    %1659 = vmatpush.bf16.msra.mxu0 0
    %1660 = vmatpush.bf16.msra.mxu0 0
    %1661 = vmatpush.bf16.msra.mxu0 0
    %1662 = vmatpush.bf16.msra.mxu0 0
    %1663 = vmatpush.bf16.msra.mxu0 %v1179
    %1664 = vmatpush.bf16.msra.mxu0 %v1081
    %1665 = vmatmul.bf16.gmra.mxu0 %v1460
    %v1666 = vpop.f32.mrf.mxu0
    %v1667 = vadd.f32 %v297, %v1666
    %v1668 = vpop.f32.mrf.mxu0
    %1669 = vdwg.mxu0
    %1670 = vmatpush.bf16.msra.mxu0 0
    %1671 = vmatpush.bf16.msra.mxu0 0
    %1672 = vmatpush.bf16.msra.mxu0 0
    %1673 = vmatpush.bf16.msra.mxu0 0
    %1674 = vmatpush.bf16.msra.mxu0 0
    %1675 = vmatpush.bf16.msra.mxu0 0
    %1676 = vmatpush.bf16.msra.mxu0 %v1180
    %1677 = vmatpush.bf16.msra.mxu0 %v1082
    %1678 = vmatmul.bf16.gmra.mxu0 %v1460
    %v1679 = vpop.f32.mrf.mxu0
    %v1680 = vadd.f32 %v298, %v1679
    %v1681 = vpop.f32.mrf.mxu0
    %1682 = vdwg.mxu0
    %1683 = vmatpush.bf16.msra.mxu0 0
    %1684 = vmatpush.bf16.msra.mxu0 0
    %1685 = vmatpush.bf16.msra.mxu0 0
    %1686 = vmatpush.bf16.msra.mxu0 0
    %1687 = vmatpush.bf16.msra.mxu0 0
    %1688 = vmatpush.bf16.msra.mxu0 0
    %1689 = vmatpush.bf16.msra.mxu0 %v1181
    %1690 = vmatpush.bf16.msra.mxu0 %v1083
    %1691 = vmatmul.bf16.gmra.mxu0 %v1460
    %v1692 = vpop.f32.mrf.mxu0
    %v1693 = vadd.f32 %v299, %v1692
    %v1694 = vpop.f32.mrf.mxu0
    %1695 = vdwg.mxu0
    %1696 = vmatpush.bf16.msra.mxu0 0
    %1697 = vmatpush.bf16.msra.mxu0 0
    %1698 = vmatpush.bf16.msra.mxu0 0
    %1699 = vmatpush.bf16.msra.mxu0 0
    %1700 = vmatpush.bf16.msra.mxu0 0
    %1701 = vmatpush.bf16.msra.mxu0 0
    %1702 = vmatpush.bf16.msra.mxu0 %v1182
    %1703 = vmatpush.bf16.msra.mxu0 %v1084
    %1704 = vmatmul.bf16.gmra.mxu0 %v1460
    %v1705 = vpop.f32.mrf.mxu0
    %v1706 = vadd.f32 %v300, %v1705
    %v1707 = vpop.f32.mrf.mxu0
    %1708 = vdwg.mxu0
    %1709 = vmatpush.bf16.msra.mxu0 0
    %1710 = vmatpush.bf16.msra.mxu0 0
    %1711 = vmatpush.bf16.msra.mxu0 0
    %1712 = vmatpush.bf16.msra.mxu0 0
    %1713 = vmatpush.bf16.msra.mxu0 0
    %1714 = vmatpush.bf16.msra.mxu0 0
    %1715 = vmatpush.bf16.msra.mxu0 %v1183
    %1716 = vmatpush.bf16.msra.mxu0 %v1085
    %1717 = vmatmul.bf16.gmra.mxu0 %v1460
    %v1718 = vpop.f32.mrf.mxu0
    %v1719 = vadd.f32 %v301, %v1718
    %v1720 = vpop.f32.mrf.mxu0
    %1721 = vdwg.mxu0
    %1722 = vmatpush.bf16.msra.mxu0 0
    %1723 = vmatpush.bf16.msra.mxu0 0
    %1724 = vmatpush.bf16.msra.mxu0 0
    %1725 = vmatpush.bf16.msra.mxu0 0
    %1726 = vmatpush.bf16.msra.mxu0 0
    %1727 = vmatpush.bf16.msra.mxu0 0
    %1728 = vmatpush.bf16.msra.mxu0 %v1184
    %1729 = vmatpush.bf16.msra.mxu0 %v1086
    %1730 = vmatmul.bf16.gmra.mxu0 %v1460
    %v1731 = vpop.f32.mrf.mxu0
    %v1732 = vadd.f32 %v302, %v1731
    %v1733 = vpop.f32.mrf.mxu0
    %1734 = vdwg.mxu0
    %1735 = vmatpush.bf16.msra.mxu0 0
    %1736 = vmatpush.bf16.msra.mxu0 0
    %1737 = vmatpush.bf16.msra.mxu0 0
    %1738 = vmatpush.bf16.msra.mxu0 0
    %1739 = vmatpush.bf16.msra.mxu0 0
    %1740 = vmatpush.bf16.msra.mxu0 0
    %1741 = vmatpush.bf16.msra.mxu0 %v1185
    %1742 = vmatpush.bf16.msra.mxu0 %v1087
    %1743 = vmatmul.bf16.gmra.mxu0 %v1460
    %v1744 = vpop.f32.mrf.mxu0
    %v1745 = vadd.f32 %v303, %v1744
    %v1746 = vpop.f32.mrf.mxu0
    %1747 = vdwg.mxu0
    %1748 = vmatpush.bf16.msra.mxu0 0
    %1749 = vmatpush.bf16.msra.mxu0 0
    %1750 = vmatpush.bf16.msra.mxu0 0
    %1751 = vmatpush.bf16.msra.mxu0 0
    %1752 = vmatpush.bf16.msra.mxu0 0
    %1753 = vmatpush.bf16.msra.mxu0 0
    %1754 = vmatpush.bf16.msra.mxu0 %v1186
    %1755 = vmatpush.bf16.msra.mxu0 %v1088
    %1756 = vmatmul.bf16.gmra.mxu0 %v1460
    %v1757 = vpop.f32.mrf.mxu0
    %v1758 = vadd.f32 %v304, %v1757
    %v1759 = vpop.f32.mrf.mxu0
    %1760 = vdwg.mxu0
    %1761 = vmatpush.bf16.msra.mxu0 0
    %1762 = vmatpush.bf16.msra.mxu0 0
    %1763 = vmatpush.bf16.msra.mxu0 0
    %1764 = vmatpush.bf16.msra.mxu0 0
    %1765 = vmatpush.bf16.msra.mxu0 0
    %1766 = vmatpush.bf16.msra.mxu0 0
    %1767 = vmatpush.bf16.msra.mxu0 %v1187
    %1768 = vmatpush.bf16.msra.mxu0 %v1089
    %1769 = vmatmul.bf16.gmra.mxu0 %v1460
    %v1770 = vpop.f32.mrf.mxu0
    %v1771 = vadd.f32 %v305, %v1770
    %v1772 = vpop.f32.mrf.mxu0
    %1773 = vdwg.mxu0
    %1774 = vmatpush.bf16.msra.mxu0 0
    %1775 = vmatpush.bf16.msra.mxu0 0
    %1776 = vmatpush.bf16.msra.mxu0 0
    %1777 = vmatpush.bf16.msra.mxu0 0
    %1778 = vmatpush.bf16.msra.mxu0 0
    %1779 = vmatpush.bf16.msra.mxu0 0
    %1780 = vmatpush.bf16.msra.mxu0 %v1188
    %1781 = vmatpush.bf16.msra.mxu0 %v1090
    %1782 = vmatmul.bf16.gmra.mxu0 %v1460
    %v1783 = vpop.f32.mrf.mxu0
    %v1784 = vadd.f32 %v306, %v1783
    %v1785 = vpop.f32.mrf.mxu0
    %1786 = vdwg.mxu0
    %1787 = vmatpush.bf16.msra.mxu0 0
    %1788 = vmatpush.bf16.msra.mxu0 0
    %1789 = vmatpush.bf16.msra.mxu0 0
    %1790 = vmatpush.bf16.msra.mxu0 0
    %1791 = vmatpush.bf16.msra.mxu0 0
    %1792 = vmatpush.bf16.msra.mxu0 0
    %1793 = vmatpush.bf16.msra.mxu0 %v1189
    %1794 = vmatpush.bf16.msra.mxu0 %v1091
    %1795 = vmatmul.bf16.gmra.mxu0 %v1460
    %v1796 = vpop.f32.mrf.mxu0
    %v1797 = vadd.f32 %v307, %v1796
    %v1798 = vpop.f32.mrf.mxu0
    %1799 = vdwg.mxu0
    %1800 = vmatpush.bf16.msra.mxu0 0
    %1801 = vmatpush.bf16.msra.mxu0 0
    %1802 = vmatpush.bf16.msra.mxu0 0
    %1803 = vmatpush.bf16.msra.mxu0 0
    %1804 = vmatpush.bf16.msra.mxu0 0
    %1805 = vmatpush.bf16.msra.mxu0 0
    %1806 = vmatpush.bf16.msra.mxu0 %v1190
    %1807 = vmatpush.bf16.msra.mxu0 %v1092
    %1808 = vmatmul.bf16.gmra.mxu0 %v1460
    %v1809 = vpop.f32.mrf.mxu0
    %v1810 = vadd.f32 %v308, %v1809
    %v1811 = vpop.f32.mrf.mxu0
    %1812 = vdwg.mxu0
    %1813 = vmatpush.bf16.msra.mxu0 0
    %1814 = vmatpush.bf16.msra.mxu0 0
    %1815 = vmatpush.bf16.msra.mxu0 0
    %1816 = vmatpush.bf16.msra.mxu0 0
    %1817 = vmatpush.bf16.msra.mxu0 0
    %1818 = vmatpush.bf16.msra.mxu0 0
    %1819 = vmatpush.bf16.msra.mxu0 %v1191
    %1820 = vmatpush.bf16.msra.mxu0 %v1093
    %1821 = vmatmul.bf16.gmra.mxu0 %v1460
    %v1822 = vpop.f32.mrf.mxu0
    %v1823 = vadd.f32 %v309, %v1822
    %v1824 = vpop.f32.mrf.mxu0
    %1825 = vdwg.mxu0
    %1826 = vmatpush.bf16.msra.mxu0 0
    %1827 = vmatpush.bf16.msra.mxu0 0
    %1828 = vmatpush.bf16.msra.mxu0 0
    %1829 = vmatpush.bf16.msra.mxu0 0
    %1830 = vmatpush.bf16.msra.mxu0 0
    %1831 = vmatpush.bf16.msra.mxu0 0
    %1832 = vmatpush.bf16.msra.mxu0 %v1192
    %1833 = vmatpush.bf16.msra.mxu0 %v1094
    %1834 = vmatmul.bf16.gmra.mxu0 %v1460
    %v1835 = vpop.f32.mrf.mxu0
    %v1836 = vadd.f32 %v310, %v1835
    %v1837 = vpop.f32.mrf.mxu0
    %1838 = vdwg.mxu0
    %1839 = vmatpush.bf16.msra.mxu0 0
    %1840 = vmatpush.bf16.msra.mxu0 0
    %1841 = vmatpush.bf16.msra.mxu0 0
    %1842 = vmatpush.bf16.msra.mxu0 0
    %1843 = vmatpush.bf16.msra.mxu0 0
    %1844 = vmatpush.bf16.msra.mxu0 0
    %1845 = vmatpush.bf16.msra.mxu0 %v1193
    %1846 = vmatpush.bf16.msra.mxu0 %v1095
    %1847 = vmatmul.bf16.gmra.mxu0 %v1460
    %v1848 = vpop.f32.mrf.mxu0
    %v1849 = vadd.f32 %v311, %v1848
    %v1850 = vpop.f32.mrf.mxu0
    %1851 = vdwg.mxu0
    %1852 = vmatpush.bf16.msra.mxu0 0
    %1853 = vmatpush.bf16.msra.mxu0 0
    %1854 = vmatpush.bf16.msra.mxu0 0
    %1855 = vmatpush.bf16.msra.mxu0 0
    %1856 = vmatpush.bf16.msra.mxu0 0
    %1857 = vmatpush.bf16.msra.mxu0 0
    %1858 = vmatpush.bf16.msra.mxu0 %v1194
    %1859 = vmatpush.bf16.msra.mxu0 %v1096
    %1860 = vmatmul.bf16.gmra.mxu0 %v1460
    %v1861 = vpop.f32.mrf.mxu0
    %v1862 = vadd.f32 %v312, %v1861
    %v1863 = vpop.f32.mrf.mxu0
    %1864 = vdwg.mxu0
    %1865 = vmatpush.bf16.msra.mxu0 0
    %1866 = vmatpush.bf16.msra.mxu0 0
    %1867 = vmatpush.bf16.msra.mxu0 0
    %1868 = vmatpush.bf16.msra.mxu0 0
    %1869 = vmatpush.bf16.msra.mxu0 0
    %1870 = vmatpush.bf16.msra.mxu0 0
    %1871 = vmatpush.bf16.msra.mxu0 %v1195
    %1872 = vmatpush.bf16.msra.mxu0 %v1097
    %1873 = vmatmul.bf16.gmra.mxu0 %v1460
    %v1874 = vpop.f32.mrf.mxu0
    %v1875 = vadd.f32 %v313, %v1874
    %v1876 = vpop.f32.mrf.mxu0
    %1877 = vdwg.mxu0
    %1878 = vmatpush.bf16.msra.mxu0 0
    %1879 = vmatpush.bf16.msra.mxu0 0
    %1880 = vmatpush.bf16.msra.mxu0 0
    %1881 = vmatpush.bf16.msra.mxu0 0
    %1882 = vmatpush.bf16.msra.mxu0 0
    %1883 = vmatpush.bf16.msra.mxu0 0
    %1884 = vmatpush.bf16.msra.mxu0 %v1196
    %1885 = vmatpush.bf16.msra.mxu0 %v1098
    %1886 = vmatmul.bf16.gmra.mxu0 %v1460
    %v1887 = vpop.f32.mrf.mxu0
    %v1888 = vadd.f32 %v314, %v1887
    %v1889 = vpop.f32.mrf.mxu0
    %1890 = vdwg.mxu0
    %1891 = vmatpush.bf16.msra.mxu0 0
    %1892 = vmatpush.bf16.msra.mxu0 0
    %1893 = vmatpush.bf16.msra.mxu0 0
    %1894 = vmatpush.bf16.msra.mxu0 0
    %1895 = vmatpush.bf16.msra.mxu0 0
    %1896 = vmatpush.bf16.msra.mxu0 0
    %1897 = vmatpush.bf16.msra.mxu0 %v1197
    %1898 = vmatpush.bf16.msra.mxu0 %v1099
    %1899 = vmatmul.bf16.gmra.mxu0 %v1460
    %v1900 = vpop.f32.mrf.mxu0
    %v1901 = vadd.f32 %v315, %v1900
    %v1902 = vpop.f32.mrf.mxu0
    %1903 = vdwg.mxu0
    %1904 = vmatpush.bf16.msra.mxu0 0
    %1905 = vmatpush.bf16.msra.mxu0 0
    %1906 = vmatpush.bf16.msra.mxu0 0
    %1907 = vmatpush.bf16.msra.mxu0 0
    %1908 = vmatpush.bf16.msra.mxu0 0
    %1909 = vmatpush.bf16.msra.mxu0 0
    %1910 = vmatpush.bf16.msra.mxu0 %v1198
    %1911 = vmatpush.bf16.msra.mxu0 %v1100
    %1912 = vmatmul.bf16.gmra.mxu0 %v1460
    %v1913 = vpop.f32.mrf.mxu0
    %v1914 = vadd.f32 %v316, %v1913
    %v1915 = vpop.f32.mrf.mxu0
    %1916 = vdwg.mxu0
    %1917 = vmatpush.bf16.msra.mxu0 0
    %1918 = vmatpush.bf16.msra.mxu0 0
    %1919 = vmatpush.bf16.msra.mxu0 0
    %1920 = vmatpush.bf16.msra.mxu0 0
    %1921 = vmatpush.bf16.msra.mxu0 0
    %1922 = vmatpush.bf16.msra.mxu0 0
    %1923 = vmatpush.bf16.msra.mxu0 %v1199
    %1924 = vmatpush.bf16.msra.mxu0 %v1101
    %1925 = vmatmul.bf16.gmra.mxu0 %v1460
    %v1926 = vpop.f32.mrf.mxu0
    %v1927 = vadd.f32 %v317, %v1926
    %v1928 = vpop.f32.mrf.mxu0
    %1929 = vdwg.mxu0
    %1930 = vmatpush.bf16.msra.mxu0 0
    %1931 = vmatpush.bf16.msra.mxu0 0
    %1932 = vmatpush.bf16.msra.mxu0 0
    %1933 = vmatpush.bf16.msra.mxu0 0
    %1934 = vmatpush.bf16.msra.mxu0 0
    %1935 = vmatpush.bf16.msra.mxu0 0
    %1936 = vmatpush.bf16.msra.mxu0 %v1200
    %1937 = vmatpush.bf16.msra.mxu0 %v1102
    %1938 = vmatmul.bf16.gmra.mxu0 %v1460
    %v1939 = vpop.f32.mrf.mxu0
    %v1940 = vadd.f32 %v318, %v1939
    %v1941 = vpop.f32.mrf.mxu0
    %1942 = vdwg.mxu0
    %1943 = vmatpush.bf16.msra.mxu0 0
    %1944 = vmatpush.bf16.msra.mxu0 0
    %1945 = vmatpush.bf16.msra.mxu0 0
    %1946 = vmatpush.bf16.msra.mxu0 0
    %1947 = vmatpush.bf16.msra.mxu0 0
    %1948 = vmatpush.bf16.msra.mxu0 0
    %1949 = vmatpush.bf16.msra.mxu0 %v1201
    %1950 = vmatpush.bf16.msra.mxu0 %v1103
    %1951 = vmatmul.bf16.gmra.mxu0 %v1460
    %v1952 = vpop.f32.mrf.mxu0
    %v1953 = vadd.f32 %v319, %v1952
    %v1954 = vpop.f32.mrf.mxu0
    %1955 = vdwg.mxu0
    %1956 = vmatpush.bf16.msra.mxu0 0
    %1957 = vmatpush.bf16.msra.mxu0 0
    %1958 = vmatpush.bf16.msra.mxu0 0
    %1959 = vmatpush.bf16.msra.mxu0 0
    %1960 = vmatpush.bf16.msra.mxu0 0
    %1961 = vmatpush.bf16.msra.mxu0 0
    %1962 = vmatpush.bf16.msra.mxu0 %v1202
    %1963 = vmatpush.bf16.msra.mxu0 %v1104
    %1964 = vmatmul.bf16.gmra.mxu0 %v1460
    %v1965 = vpop.f32.mrf.mxu0
    %v1966 = vadd.f32 %v320, %v1965
    %v1967 = vpop.f32.mrf.mxu0
    %1968 = vdwg.mxu0
    %1969 = vmatpush.bf16.msra.mxu0 0
    %1970 = vmatpush.bf16.msra.mxu0 0
    %1971 = vmatpush.bf16.msra.mxu0 0
    %1972 = vmatpush.bf16.msra.mxu0 0
    %1973 = vmatpush.bf16.msra.mxu0 0
    %1974 = vmatpush.bf16.msra.mxu0 0
    %1975 = vmatpush.bf16.msra.mxu0 %v1203
    %1976 = vmatpush.bf16.msra.mxu0 %v1105
    %1977 = vmatmul.bf16.gmra.mxu0 %v1460
    %v1978 = vpop.f32.mrf.mxu0
    %v1979 = vadd.f32 %v321, %v1978
    %v1980 = vpop.f32.mrf.mxu0
    %1981 = vdwg.mxu0
    %1982 = vmatpush.bf16.msra.mxu0 0
    %1983 = vmatpush.bf16.msra.mxu0 0
    %1984 = vmatpush.bf16.msra.mxu0 0
    %1985 = vmatpush.bf16.msra.mxu0 0
    %1986 = vmatpush.bf16.msra.mxu0 0
    %1987 = vmatpush.bf16.msra.mxu0 0
    %1988 = vmatpush.bf16.msra.mxu0 %v1204
    %1989 = vmatpush.bf16.msra.mxu0 %v1106
    %1990 = vmatmul.bf16.gmra.mxu0 %v1460
    %v1991 = vpop.f32.mrf.mxu0
    %v1992 = vadd.f32 %v322, %v1991
    %v1993 = vpop.f32.mrf.mxu0
    %1994 = vdwg.mxu0
    %1995 = vmatpush.bf16.msra.mxu0 0
    %1996 = vmatpush.bf16.msra.mxu0 0
    %1997 = vmatpush.bf16.msra.mxu0 0
    %1998 = vmatpush.bf16.msra.mxu0 0
    %1999 = vmatpush.bf16.msra.mxu0 0
    %2000 = vmatpush.bf16.msra.mxu0 0
    %2001 = vmatpush.bf16.msra.mxu0 %v1205
    %2002 = vmatpush.bf16.msra.mxu0 %v1107
    %2003 = vmatmul.bf16.gmra.mxu0 %v1460
    %v2004 = vpop.f32.mrf.mxu0
    %v2005 = vadd.f32 %v323, %v2004
    %v2006 = vpop.f32.mrf.mxu0
    %2007 = vdwg.mxu0
    %2008 = vmatpush.bf16.msra.mxu0 0
    %2009 = vmatpush.bf16.msra.mxu0 0
    %2010 = vmatpush.bf16.msra.mxu0 0
    %2011 = vmatpush.bf16.msra.mxu0 0
    %2012 = vmatpush.bf16.msra.mxu0 0
    %2013 = vmatpush.bf16.msra.mxu0 0
    %2014 = vmatpush.bf16.msra.mxu0 %v1206
    %2015 = vmatpush.bf16.msra.mxu0 %v1108
    %2016 = vmatmul.bf16.gmra.mxu0 %v1460
    %v2017 = vpop.f32.mrf.mxu0
    %v2018 = vadd.f32 %v324, %v2017
    %v2019 = vpop.f32.mrf.mxu0
    %2020 = vdwg.mxu0
    %2021 = vmatpush.bf16.msra.mxu0 0
    %2022 = vmatpush.bf16.msra.mxu0 0
    %2023 = vmatpush.bf16.msra.mxu0 0
    %2024 = vmatpush.bf16.msra.mxu0 0
    %2025 = vmatpush.bf16.msra.mxu0 0
    %2026 = vmatpush.bf16.msra.mxu0 0
    %2027 = vmatpush.bf16.msra.mxu0 %v1207
    %2028 = vmatpush.bf16.msra.mxu0 %v1109
    %2029 = vmatmul.bf16.gmra.mxu0 %v1460
    %v2030 = vpop.f32.mrf.mxu0
    %v2031 = vadd.f32 %v325, %v2030
    %v2032 = vpop.f32.mrf.mxu0
    %2033 = vdwg.mxu0
    %2034 = vmatpush.bf16.msra.mxu0 0
    %2035 = vmatpush.bf16.msra.mxu0 0
    %2036 = vmatpush.bf16.msra.mxu0 0
    %2037 = vmatpush.bf16.msra.mxu0 0
    %2038 = vmatpush.bf16.msra.mxu0 0
    %2039 = vmatpush.bf16.msra.mxu0 0
    %2040 = vmatpush.bf16.msra.mxu0 %v1208
    %2041 = vmatpush.bf16.msra.mxu0 %v1110
    %2042 = vmatmul.bf16.gmra.mxu0 %v1460
    %v2043 = vpop.f32.mrf.mxu0
    %v2044 = vadd.f32 %v326, %v2043
    %v2045 = vpop.f32.mrf.mxu0
    %2046 = vdwg.mxu0
    %2047 = vmatpush.bf16.msra.mxu0 0
    %2048 = vmatpush.bf16.msra.mxu0 0
    %2049 = vmatpush.bf16.msra.mxu0 0
    %2050 = vmatpush.bf16.msra.mxu0 0
    %2051 = vmatpush.bf16.msra.mxu0 0
    %2052 = vmatpush.bf16.msra.mxu0 0
    %2053 = vmatpush.bf16.msra.mxu0 %v1209
    %2054 = vmatpush.bf16.msra.mxu0 %v1111
    %2055 = vmatmul.bf16.gmra.mxu0 %v1460
    %v2056 = vpop.f32.mrf.mxu0
    %v2057 = vadd.f32 %v327, %v2056
    %v2058 = vpop.f32.mrf.mxu0
    %2059 = vdwg.mxu0
    %2060 = vmatpush.bf16.msra.mxu0 0
    %2061 = vmatpush.bf16.msra.mxu0 0
    %2062 = vmatpush.bf16.msra.mxu0 0
    %2063 = vmatpush.bf16.msra.mxu0 0
    %2064 = vmatpush.bf16.msra.mxu0 0
    %2065 = vmatpush.bf16.msra.mxu0 0
    %2066 = vmatpush.bf16.msra.mxu0 %v1210
    %2067 = vmatpush.bf16.msra.mxu0 %v1112
    %2068 = vmatmul.bf16.gmra.mxu0 %v1460
    %v2069 = vpop.f32.mrf.mxu0
    %v2070 = vadd.f32 %v328, %v2069
    %v2071 = vpop.f32.mrf.mxu0
    %2072 = vdwg.mxu0
    %2073 = vmatpush.bf16.msra.mxu0 0
    %2074 = vmatpush.bf16.msra.mxu0 0
    %2075 = vmatpush.bf16.msra.mxu0 0
    %2076 = vmatpush.bf16.msra.mxu0 0
    %2077 = vmatpush.bf16.msra.mxu0 0
    %2078 = vmatpush.bf16.msra.mxu0 0
    %2079 = vmatpush.bf16.msra.mxu0 %v1211
    %2080 = vmatpush.bf16.msra.mxu0 %v1113
    %2081 = vmatmul.bf16.gmra.mxu0 %v1460
    %v2082 = vpop.f32.mrf.mxu0
    %v2083 = vadd.f32 %v329, %v2082
    %v2084 = vpop.f32.mrf.mxu0
    %2085 = vdwg.mxu0
    %2086 = vmatpush.bf16.msra.mxu0 0
    %2087 = vmatpush.bf16.msra.mxu0 0
    %2088 = vmatpush.bf16.msra.mxu0 0
    %2089 = vmatpush.bf16.msra.mxu0 0
    %2090 = vmatpush.bf16.msra.mxu0 0
    %2091 = vmatpush.bf16.msra.mxu0 0
    %2092 = vmatpush.bf16.msra.mxu0 %v1212
    %2093 = vmatpush.bf16.msra.mxu0 %v1114
    %2094 = vmatmul.bf16.gmra.mxu0 %v1460
    %v2095 = vpop.f32.mrf.mxu0
    %v2096 = vadd.f32 %v330, %v2095
    %v2097 = vpop.f32.mrf.mxu0
    %2098 = vdwg.mxu0
    %2099 = vmatpush.bf16.msra.mxu0 0
    %2100 = vmatpush.bf16.msra.mxu0 0
    %2101 = vmatpush.bf16.msra.mxu0 0
    %2102 = vmatpush.bf16.msra.mxu0 0
    %2103 = vmatpush.bf16.msra.mxu0 0
    %2104 = vmatpush.bf16.msra.mxu0 0
    %2105 = vmatpush.bf16.msra.mxu0 %v1213
    %2106 = vmatpush.bf16.msra.mxu0 %v1115
    %2107 = vmatmul.bf16.gmra.mxu0 %v1460
    %v2108 = vpop.f32.mrf.mxu0
    %v2109 = vadd.f32 %v331, %v2108
    %v2110 = vpop.f32.mrf.mxu0
    %2111 = vdwg.mxu0
    %2112 = vmatpush.bf16.msra.mxu0 0
    %2113 = vmatpush.bf16.msra.mxu0 0
    %2114 = vmatpush.bf16.msra.mxu0 0
    %2115 = vmatpush.bf16.msra.mxu0 0
    %2116 = vmatpush.bf16.msra.mxu0 0
    %2117 = vmatpush.bf16.msra.mxu0 0
    %2118 = vmatpush.bf16.msra.mxu0 %v1214
    %2119 = vmatpush.bf16.msra.mxu0 %v1116
    %2120 = vmatmul.bf16.gmra.mxu0 %v1460
    %v2121 = vpop.f32.mrf.mxu0
    %v2122 = vadd.f32 %v332, %v2121
    %v2123 = vpop.f32.mrf.mxu0
    %2124 = vdwg.mxu0
    %2125 = vmatpush.bf16.msra.mxu0 0
    %2126 = vmatpush.bf16.msra.mxu0 0
    %2127 = vmatpush.bf16.msra.mxu0 0
    %2128 = vmatpush.bf16.msra.mxu0 0
    %2129 = vmatpush.bf16.msra.mxu0 0
    %2130 = vmatpush.bf16.msra.mxu0 0
    %2131 = vmatpush.bf16.msra.mxu0 %v1215
    %2132 = vmatpush.bf16.msra.mxu0 %v1117
    %2133 = vmatmul.bf16.gmra.mxu0 %v1460
    %v2134 = vpop.f32.mrf.mxu0
    %v2135 = vadd.f32 %v333, %v2134
    %v2136 = vpop.f32.mrf.mxu0
    %2137 = vdwg.mxu0
    %2138 = vmatpush.bf16.msra.mxu0 0
    %2139 = vmatpush.bf16.msra.mxu0 0
    %2140 = vmatpush.bf16.msra.mxu0 0
    %2141 = vmatpush.bf16.msra.mxu0 0
    %2142 = vmatpush.bf16.msra.mxu0 0
    %2143 = vmatpush.bf16.msra.mxu0 0
    %2144 = vmatpush.bf16.msra.mxu0 %v1216
    %2145 = vmatpush.bf16.msra.mxu0 %v1118
    %2146 = vmatmul.bf16.gmra.mxu0 %v1460
    %v2147 = vpop.f32.mrf.mxu0
    %v2148 = vadd.f32 %v334, %v2147
    %v2149 = vpop.f32.mrf.mxu0
    %2150 = vdwg.mxu0
    %2151 = vmatpush.bf16.msra.mxu0 0
    %2152 = vmatpush.bf16.msra.mxu0 0
    %2153 = vmatpush.bf16.msra.mxu0 0
    %2154 = vmatpush.bf16.msra.mxu0 0
    %2155 = vmatpush.bf16.msra.mxu0 0
    %2156 = vmatpush.bf16.msra.mxu0 0
    %2157 = vmatpush.bf16.msra.mxu0 %v1217
    %2158 = vmatpush.bf16.msra.mxu0 %v1119
    %2159 = vmatmul.bf16.gmra.mxu0 %v1460
    %v2160 = vpop.f32.mrf.mxu0
    %v2161 = vadd.f32 %v335, %v2160
    %v2162 = vpop.f32.mrf.mxu0
    %2163 = vdwg.mxu0
    %2164 = vmatpush.bf16.msra.mxu0 0
    %2165 = vmatpush.bf16.msra.mxu0 0
    %2166 = vmatpush.bf16.msra.mxu0 0
    %2167 = vmatpush.bf16.msra.mxu0 0
    %2168 = vmatpush.bf16.msra.mxu0 0
    %2169 = vmatpush.bf16.msra.mxu0 0
    %2170 = vmatpush.bf16.msra.mxu0 %v1218
    %2171 = vmatpush.bf16.msra.mxu0 %v1120
    %2172 = vmatmul.bf16.gmra.mxu0 %v1460
    %v2173 = vpop.f32.mrf.mxu0
    %v2174 = vadd.f32 %v336, %v2173
    %v2175 = vpop.f32.mrf.mxu0
    %2176 = vdwg.mxu0
    %2177 = vmatpush.bf16.msra.mxu0 0
    %2178 = vmatpush.bf16.msra.mxu0 0
    %2179 = vmatpush.bf16.msra.mxu0 0
    %2180 = vmatpush.bf16.msra.mxu0 0
    %2181 = vmatpush.bf16.msra.mxu0 0
    %2182 = vmatpush.bf16.msra.mxu0 0
    %2183 = vmatpush.bf16.msra.mxu0 %v1219
    %2184 = vmatpush.bf16.msra.mxu0 %v1121
    %2185 = vmatmul.bf16.gmra.mxu0 %v1460
    %v2186 = vpop.f32.mrf.mxu0
    %v2187 = vadd.f32 %v337, %v2186
    %v2188 = vpop.f32.mrf.mxu0
    %2189 = vdwg.mxu0
    %2190 = vmatpush.bf16.msra.mxu0 0
    %2191 = vmatpush.bf16.msra.mxu0 0
    %2192 = vmatpush.bf16.msra.mxu0 0
    %2193 = vmatpush.bf16.msra.mxu0 0
    %2194 = vmatpush.bf16.msra.mxu0 0
    %2195 = vmatpush.bf16.msra.mxu0 0
    %2196 = vmatpush.bf16.msra.mxu0 %v1220
    %2197 = vmatpush.bf16.msra.mxu0 %v1122
    %2198 = vmatmul.bf16.gmra.mxu0 %v1460
    %v2199 = vpop.f32.mrf.mxu0
    %v2200 = vadd.f32 %v338, %v2199
    %v2201 = vpop.f32.mrf.mxu0
    %2202 = vdwg.mxu0
    %2203 = vmatpush.bf16.msra.mxu0 0
    %2204 = vmatpush.bf16.msra.mxu0 0
    %2205 = vmatpush.bf16.msra.mxu0 0
    %2206 = vmatpush.bf16.msra.mxu0 0
    %2207 = vmatpush.bf16.msra.mxu0 0
    %2208 = vmatpush.bf16.msra.mxu0 0
    %2209 = vmatpush.bf16.msra.mxu0 %v1221
    %2210 = vmatpush.bf16.msra.mxu0 %v1123
    %2211 = vmatmul.bf16.gmra.mxu0 %v1460
    %v2212 = vpop.f32.mrf.mxu0
    %v2213 = vadd.f32 %v339, %v2212
    %v2214 = vpop.f32.mrf.mxu0
    %2215 = vdwg.mxu0
    %2216 = vmatpush.bf16.msra.mxu0 0
    %2217 = vmatpush.bf16.msra.mxu0 0
    %2218 = vmatpush.bf16.msra.mxu0 0
    %2219 = vmatpush.bf16.msra.mxu0 0
    %2220 = vmatpush.bf16.msra.mxu0 0
    %2221 = vmatpush.bf16.msra.mxu0 0
    %2222 = vmatpush.bf16.msra.mxu0 %v1222
    %2223 = vmatpush.bf16.msra.mxu0 %v1124
    %2224 = vmatmul.bf16.gmra.mxu0 %v1460
    %v2225 = vpop.f32.mrf.mxu0
    %v2226 = vadd.f32 %v340, %v2225
    %v2227 = vpop.f32.mrf.mxu0
    %2228 = vdwg.mxu0
    %2229 = vmatpush.bf16.msra.mxu0 0
    %2230 = vmatpush.bf16.msra.mxu0 0
    %2231 = vmatpush.bf16.msra.mxu0 0
    %2232 = vmatpush.bf16.msra.mxu0 0
    %2233 = vmatpush.bf16.msra.mxu0 0
    %2234 = vmatpush.bf16.msra.mxu0 0
    %2235 = vmatpush.bf16.msra.mxu0 %v1223
    %2236 = vmatpush.bf16.msra.mxu0 %v1125
    %2237 = vmatmul.bf16.gmra.mxu0 %v1460
    %v2238 = vpop.f32.mrf.mxu0
    %v2239 = vadd.f32 %v341, %v2238
    %v2240 = vpop.f32.mrf.mxu0
    %2241 = vdwg.mxu0
    %2242 = vmatpush.bf16.msra.mxu0 0
    %2243 = vmatpush.bf16.msra.mxu0 0
    %2244 = vmatpush.bf16.msra.mxu0 0
    %2245 = vmatpush.bf16.msra.mxu0 0
    %2246 = vmatpush.bf16.msra.mxu0 0
    %2247 = vmatpush.bf16.msra.mxu0 0
    %2248 = vmatpush.bf16.msra.mxu0 %v1224
    %2249 = vmatpush.bf16.msra.mxu0 %v1126
    %2250 = vmatmul.bf16.gmra.mxu0 %v1460
    %v2251 = vpop.f32.mrf.mxu0
    %v2252 = vadd.f32 %v342, %v2251
    %v2253 = vpop.f32.mrf.mxu0
    %2254 = vdwg.mxu0
    %2255 = vmatpush.bf16.msra.mxu0 0
    %2256 = vmatpush.bf16.msra.mxu0 0
    %2257 = vmatpush.bf16.msra.mxu0 0
    %2258 = vmatpush.bf16.msra.mxu0 0
    %2259 = vmatpush.bf16.msra.mxu0 0
    %2260 = vmatpush.bf16.msra.mxu0 0
    %2261 = vmatpush.bf16.msra.mxu0 %v1225
    %2262 = vmatpush.bf16.msra.mxu0 %v1127
    %2263 = vmatmul.bf16.gmra.mxu0 %v1460
    %v2264 = vpop.f32.mrf.mxu0
    %v2265 = vadd.f32 %v343, %v2264
    %v2266 = vpop.f32.mrf.mxu0
    %2267 = vdwg.mxu0
    %2268 = vmatpush.bf16.msra.mxu0 0
    %2269 = vmatpush.bf16.msra.mxu0 0
    %2270 = vmatpush.bf16.msra.mxu0 0
    %2271 = vmatpush.bf16.msra.mxu0 0
    %2272 = vmatpush.bf16.msra.mxu0 0
    %2273 = vmatpush.bf16.msra.mxu0 0
    %2274 = vmatpush.bf16.msra.mxu0 %v1226
    %2275 = vmatpush.bf16.msra.mxu0 %v1128
    %2276 = vmatmul.bf16.gmra.mxu0 %v1460
    %v2277 = vpop.f32.mrf.mxu0
    %v2278 = vadd.f32 %v344, %v2277
    %v2279 = vpop.f32.mrf.mxu0
    %2280 = vdwg.mxu0
    %2281 = vmatpush.bf16.msra.mxu0 0
    %2282 = vmatpush.bf16.msra.mxu0 0
    %2283 = vmatpush.bf16.msra.mxu0 0
    %2284 = vmatpush.bf16.msra.mxu0 0
    %2285 = vmatpush.bf16.msra.mxu0 0
    %2286 = vmatpush.bf16.msra.mxu0 0
    %2287 = vmatpush.bf16.msra.mxu0 %v1227
    %2288 = vmatpush.bf16.msra.mxu0 %v1129
    %2289 = vmatmul.bf16.gmra.mxu0 %v1460
    %v2290 = vpop.f32.mrf.mxu0
    %v2291 = vadd.f32 %v345, %v2290
    %v2292 = vpop.f32.mrf.mxu0
    %2293 = vdwg.mxu0
    %2294 = vmatpush.bf16.msra.mxu0 0
    %2295 = vmatpush.bf16.msra.mxu0 0
    %2296 = vmatpush.bf16.msra.mxu0 0
    %2297 = vmatpush.bf16.msra.mxu0 0
    %2298 = vmatpush.bf16.msra.mxu0 0
    %2299 = vmatpush.bf16.msra.mxu0 0
    %2300 = vmatpush.bf16.msra.mxu0 %v1228
    %2301 = vmatpush.bf16.msra.mxu0 %v1130
    %2302 = vmatmul.bf16.gmra.mxu0 %v1460
    %v2303 = vpop.f32.mrf.mxu0
    %v2304 = vadd.f32 %v346, %v2303
    %v2305 = vpop.f32.mrf.mxu0
    %2306 = vdwg.mxu0
    %2307 = vmatpush.bf16.msra.mxu0 0
    %2308 = vmatpush.bf16.msra.mxu0 0
    %2309 = vmatpush.bf16.msra.mxu0 0
    %2310 = vmatpush.bf16.msra.mxu0 0
    %2311 = vmatpush.bf16.msra.mxu0 0
    %2312 = vmatpush.bf16.msra.mxu0 0
    %2313 = vmatpush.bf16.msra.mxu0 %v1229
    %2314 = vmatpush.bf16.msra.mxu0 %v1131
    %2315 = vmatmul.bf16.gmra.mxu0 %v1460
    %v2316 = vpop.f32.mrf.mxu0
    %v2317 = vadd.f32 %v347, %v2316
    %v2318 = vpop.f32.mrf.mxu0
    %2319 = vdwg.mxu0
    %2320 = vmatpush.bf16.msra.mxu0 0
    %2321 = vmatpush.bf16.msra.mxu0 0
    %2322 = vmatpush.bf16.msra.mxu0 0
    %2323 = vmatpush.bf16.msra.mxu0 0
    %2324 = vmatpush.bf16.msra.mxu0 0
    %2325 = vmatpush.bf16.msra.mxu0 0
    %2326 = vmatpush.bf16.msra.mxu0 %v1230
    %2327 = vmatpush.bf16.msra.mxu0 %v1132
    %2328 = vmatmul.bf16.gmra.mxu0 %v1460
    %v2329 = vpop.f32.mrf.mxu0
    %v2330 = vadd.f32 %v348, %v2329
    %v2331 = vpop.f32.mrf.mxu0
    %2332 = vdwg.mxu0
    %2333 = vmatpush.bf16.msra.mxu0 0
    %2334 = vmatpush.bf16.msra.mxu0 0
    %2335 = vmatpush.bf16.msra.mxu0 0
    %2336 = vmatpush.bf16.msra.mxu0 0
    %2337 = vmatpush.bf16.msra.mxu0 0
    %2338 = vmatpush.bf16.msra.mxu0 0
    %2339 = vmatpush.bf16.msra.mxu0 %v1231
    %2340 = vmatpush.bf16.msra.mxu0 %v1133
    %2341 = vmatmul.bf16.gmra.mxu0 %v1460
    %v2342 = vpop.f32.mrf.mxu0
    %v2343 = vadd.f32 %v349, %v2342
    %v2344 = vpop.f32.mrf.mxu0
    %2345 = vdwg.mxu0
    %2346 = vmatpush.bf16.msra.mxu0 0
    %2347 = vmatpush.bf16.msra.mxu0 0
    %2348 = vmatpush.bf16.msra.mxu0 0
    %2349 = vmatpush.bf16.msra.mxu0 0
    %2350 = vmatpush.bf16.msra.mxu0 0
    %2351 = vmatpush.bf16.msra.mxu0 0
    %2352 = vmatpush.bf16.msra.mxu0 %v1232
    %2353 = vmatpush.bf16.msra.mxu0 %v1134
    %2354 = vmatmul.bf16.gmra.mxu0 %v1460
    %v2355 = vpop.f32.mrf.mxu0
    %v2356 = vadd.f32 %v350, %v2355
    %v2357 = vpop.f32.mrf.mxu0
    %2358 = vdwg.mxu0
    %2359 = vmatpush.bf16.msra.mxu0 0
    %2360 = vmatpush.bf16.msra.mxu0 0
    %2361 = vmatpush.bf16.msra.mxu0 0
    %2362 = vmatpush.bf16.msra.mxu0 0
    %2363 = vmatpush.bf16.msra.mxu0 0
    %2364 = vmatpush.bf16.msra.mxu0 0
    %2365 = vmatpush.bf16.msra.mxu0 %v1233
    %2366 = vmatpush.bf16.msra.mxu0 %v1135
    %2367 = vmatmul.bf16.gmra.mxu0 %v1460
    %v2368 = vpop.f32.mrf.mxu0
    %v2369 = vadd.f32 %v351, %v2368
    %v2370 = vpop.f32.mrf.mxu0
    %2371 = vdwg.mxu0
    %2372 = vmatpush.bf16.msra.mxu0 0
    %2373 = vmatpush.bf16.msra.mxu0 0
    %2374 = vmatpush.bf16.msra.mxu0 0
    %2375 = vmatpush.bf16.msra.mxu0 0
    %2376 = vmatpush.bf16.msra.mxu0 0
    %2377 = vmatpush.bf16.msra.mxu0 0
    %2378 = vmatpush.bf16.msra.mxu0 %v1234
    %2379 = vmatpush.bf16.msra.mxu0 %v1136
    %2380 = vmatmul.bf16.gmra.mxu0 %v1460
    %v2381 = vpop.f32.mrf.mxu0
    %v2382 = vadd.f32 %v352, %v2381
    %v2383 = vpop.f32.mrf.mxu0
    %2384 = vdwg.mxu0
    %2385 = vmatpush.bf16.msra.mxu0 0
    %2386 = vmatpush.bf16.msra.mxu0 0
    %2387 = vmatpush.bf16.msra.mxu0 0
    %2388 = vmatpush.bf16.msra.mxu0 0
    %2389 = vmatpush.bf16.msra.mxu0 0
    %2390 = vmatpush.bf16.msra.mxu0 0
    %2391 = vmatpush.bf16.msra.mxu0 %v1235
    %2392 = vmatpush.bf16.msra.mxu0 %v1137
    %2393 = vmatmul.bf16.gmra.mxu0 %v1460
    %v2394 = vpop.f32.mrf.mxu0
    %v2395 = vadd.f32 %v353, %v2394
    %v2396 = vpop.f32.mrf.mxu0
    %2397 = vdwg.mxu0
    %2398 = vmatpush.bf16.msra.mxu0 0
    %2399 = vmatpush.bf16.msra.mxu0 0
    %2400 = vmatpush.bf16.msra.mxu0 0
    %2401 = vmatpush.bf16.msra.mxu0 0
    %2402 = vmatpush.bf16.msra.mxu0 0
    %2403 = vmatpush.bf16.msra.mxu0 0
    %2404 = vmatpush.bf16.msra.mxu0 %v1236
    %2405 = vmatpush.bf16.msra.mxu0 %v1138
    %2406 = vmatmul.bf16.gmra.mxu0 %v1460
    %v2407 = vpop.f32.mrf.mxu0
    %v2408 = vadd.f32 %v354, %v2407
    %v2409 = vpop.f32.mrf.mxu0
    %2410 = vdwg.mxu0
    %2411 = vmatpush.bf16.msra.mxu0 0
    %2412 = vmatpush.bf16.msra.mxu0 0
    %2413 = vmatpush.bf16.msra.mxu0 0
    %2414 = vmatpush.bf16.msra.mxu0 0
    %2415 = vmatpush.bf16.msra.mxu0 0
    %2416 = vmatpush.bf16.msra.mxu0 0
    %2417 = vmatpush.bf16.msra.mxu0 %v1237
    %2418 = vmatpush.bf16.msra.mxu0 %v1139
    %2419 = vmatmul.bf16.gmra.mxu0 %v1460
    %v2420 = vpop.f32.mrf.mxu0
    %v2421 = vadd.f32 %v355, %v2420
    %v2422 = vpop.f32.mrf.mxu0
    %2423 = vdwg.mxu0
    %2424 = vmatpush.bf16.msra.mxu0 0
    %2425 = vmatpush.bf16.msra.mxu0 0
    %2426 = vmatpush.bf16.msra.mxu0 0
    %2427 = vmatpush.bf16.msra.mxu0 0
    %2428 = vmatpush.bf16.msra.mxu0 0
    %2429 = vmatpush.bf16.msra.mxu0 0
    %2430 = vmatpush.bf16.msra.mxu0 %v1238
    %2431 = vmatpush.bf16.msra.mxu0 %v1140
    %2432 = vmatmul.bf16.gmra.mxu0 %v1460
    %v2433 = vpop.f32.mrf.mxu0
    %v2434 = vadd.f32 %v356, %v2433
    %v2435 = vpop.f32.mrf.mxu0
    %2436 = vdwg.mxu0
    %2437 = vmatpush.bf16.msra.mxu0 0
    %2438 = vmatpush.bf16.msra.mxu0 0
    %2439 = vmatpush.bf16.msra.mxu0 0
    %2440 = vmatpush.bf16.msra.mxu0 0
    %2441 = vmatpush.bf16.msra.mxu0 0
    %2442 = vmatpush.bf16.msra.mxu0 0
    %2443 = vmatpush.bf16.msra.mxu0 %v1239
    %2444 = vmatpush.bf16.msra.mxu0 %v1141
    %2445 = vmatmul.bf16.gmra.mxu0 %v1460
    %v2446 = vpop.f32.mrf.mxu0
    %v2447 = vadd.f32 %v357, %v2446
    %v2448 = vpop.f32.mrf.mxu0
    %2449 = vdwg.mxu0
    %2450 = vmatpush.bf16.msra.mxu0 0
    %2451 = vmatpush.bf16.msra.mxu0 0
    %2452 = vmatpush.bf16.msra.mxu0 0
    %2453 = vmatpush.bf16.msra.mxu0 0
    %2454 = vmatpush.bf16.msra.mxu0 0
    %2455 = vmatpush.bf16.msra.mxu0 0
    %2456 = vmatpush.bf16.msra.mxu0 %v1240
    %2457 = vmatpush.bf16.msra.mxu0 %v1142
    %2458 = vmatmul.bf16.gmra.mxu0 %v1460
    %v2459 = vpop.f32.mrf.mxu0
    %v2460 = vadd.f32 %v358, %v2459
    %v2461 = vpop.f32.mrf.mxu0
    %2462 = vdwg.mxu0
    %2463 = vmatpush.bf16.msra.mxu0 0
    %2464 = vmatpush.bf16.msra.mxu0 0
    %2465 = vmatpush.bf16.msra.mxu0 0
    %2466 = vmatpush.bf16.msra.mxu0 0
    %2467 = vmatpush.bf16.msra.mxu0 0
    %2468 = vmatpush.bf16.msra.mxu0 0
    %2469 = vmatpush.bf16.msra.mxu0 %v1241
    %2470 = vmatpush.bf16.msra.mxu0 %v1143
    %2471 = vmatmul.bf16.gmra.mxu0 %v1460
    %v2472 = vpop.f32.mrf.mxu0
    %v2473 = vadd.f32 %v359, %v2472
    %v2474 = vpop.f32.mrf.mxu0
    %2475 = vdwg.mxu0
    %2476 = vmatpush.bf16.msra.mxu0 0
    %2477 = vmatpush.bf16.msra.mxu0 0
    %2478 = vmatpush.bf16.msra.mxu0 0
    %2479 = vmatpush.bf16.msra.mxu0 0
    %2480 = vmatpush.bf16.msra.mxu0 0
    %2481 = vmatpush.bf16.msra.mxu0 0
    %2482 = vmatpush.bf16.msra.mxu0 %v1242
    %2483 = vmatpush.bf16.msra.mxu0 %v1144
    %2484 = vmatmul.bf16.gmra.mxu0 %v1460
    %v2485 = vpop.f32.mrf.mxu0
    %v2486 = vadd.f32 %v360, %v2485
    %v2487 = vpop.f32.mrf.mxu0
    %2488 = vdwg.mxu0
    %2489 = vmatpush.bf16.msra.mxu0 0
    %2490 = vmatpush.bf16.msra.mxu0 0
    %2491 = vmatpush.bf16.msra.mxu0 0
    %2492 = vmatpush.bf16.msra.mxu0 0
    %2493 = vmatpush.bf16.msra.mxu0 0
    %2494 = vmatpush.bf16.msra.mxu0 0
    %2495 = vmatpush.bf16.msra.mxu0 %v1243
    %2496 = vmatpush.bf16.msra.mxu0 %v1145
    %2497 = vmatmul.bf16.gmra.mxu0 %v1460
    %v2498 = vpop.f32.mrf.mxu0
    %v2499 = vadd.f32 %v361, %v2498
    %v2500 = vpop.f32.mrf.mxu0
    %2501 = vdwg.mxu0
    %2502 = vmatpush.bf16.msra.mxu0 0
    %2503 = vmatpush.bf16.msra.mxu0 0
    %2504 = vmatpush.bf16.msra.mxu0 0
    %2505 = vmatpush.bf16.msra.mxu0 0
    %2506 = vmatpush.bf16.msra.mxu0 0
    %2507 = vmatpush.bf16.msra.mxu0 0
    %2508 = vmatpush.bf16.msra.mxu0 %v1244
    %2509 = vmatpush.bf16.msra.mxu0 %v1146
    %2510 = vmatmul.bf16.gmra.mxu0 %v1460
    %v2511 = vpop.f32.mrf.mxu0
    %v2512 = vadd.f32 %v362, %v2511
    %v2513 = vpop.f32.mrf.mxu0
    %2514 = vdwg.mxu0
    %2515 = vmatpush.bf16.msra.mxu0 0
    %2516 = vmatpush.bf16.msra.mxu0 0
    %2517 = vmatpush.bf16.msra.mxu0 0
    %2518 = vmatpush.bf16.msra.mxu0 0
    %2519 = vmatpush.bf16.msra.mxu0 0
    %2520 = vmatpush.bf16.msra.mxu0 0
    %2521 = vmatpush.bf16.msra.mxu0 %v1245
    %2522 = vmatpush.bf16.msra.mxu0 %v1147
    %2523 = vmatmul.bf16.gmra.mxu0 %v1460
    %v2524 = vpop.f32.mrf.mxu0
    %v2525 = vadd.f32 %v363, %v2524
    %v2526 = vpop.f32.mrf.mxu0
    %2527 = vdwg.mxu0
    %2528 = vmatpush.bf16.msra.mxu0 0
    %2529 = vmatpush.bf16.msra.mxu0 0
    %2530 = vmatpush.bf16.msra.mxu0 0
    %2531 = vmatpush.bf16.msra.mxu0 0
    %2532 = vmatpush.bf16.msra.mxu0 0
    %2533 = vmatpush.bf16.msra.mxu0 0
    %2534 = vmatpush.bf16.msra.mxu0 %v1246
    %2535 = vmatpush.bf16.msra.mxu0 %v1148
    %2536 = vmatmul.bf16.gmra.mxu0 %v1460
    %v2537 = vpop.f32.mrf.mxu0
    %v2538 = vadd.f32 %v364, %v2537
    %v2539 = vpop.f32.mrf.mxu0
    %2540 = vdwg.mxu0
    %2541 = vmatpush.bf16.msra.mxu0 0
    %2542 = vmatpush.bf16.msra.mxu0 0
    %2543 = vmatpush.bf16.msra.mxu0 0
    %2544 = vmatpush.bf16.msra.mxu0 0
    %2545 = vmatpush.bf16.msra.mxu0 0
    %2546 = vmatpush.bf16.msra.mxu0 0
    %2547 = vmatpush.bf16.msra.mxu0 %v1247
    %2548 = vmatpush.bf16.msra.mxu0 %v1149
    %2549 = vmatmul.bf16.gmra.mxu0 %v1460
    %v2550 = vpop.f32.mrf.mxu0
    %v2551 = vadd.f32 %v365, %v2550
    %v2552 = vpop.f32.mrf.mxu0
    %2553 = vdwg.mxu0
    %2554 = vmatpush.bf16.msra.mxu0 0
    %2555 = vmatpush.bf16.msra.mxu0 0
    %2556 = vmatpush.bf16.msra.mxu0 0
    %2557 = vmatpush.bf16.msra.mxu0 0
    %2558 = vmatpush.bf16.msra.mxu0 0
    %2559 = vmatpush.bf16.msra.mxu0 0
    %2560 = vmatpush.bf16.msra.mxu0 %v1248
    %2561 = vmatpush.bf16.msra.mxu0 %v1150
    %2562 = vmatmul.bf16.gmra.mxu0 %v1460
    %v2563 = vpop.f32.mrf.mxu0
    %v2564 = vadd.f32 %v366, %v2563
    %v2565 = vpop.f32.mrf.mxu0
    %2566 = vdwg.mxu0
    %2567 = vmatpush.bf16.msra.mxu0 0
    %2568 = vmatpush.bf16.msra.mxu0 0
    %2569 = vmatpush.bf16.msra.mxu0 0
    %2570 = vmatpush.bf16.msra.mxu0 0
    %2571 = vmatpush.bf16.msra.mxu0 0
    %2572 = vmatpush.bf16.msra.mxu0 0
    %2573 = vmatpush.bf16.msra.mxu0 %v1249
    %2574 = vmatpush.bf16.msra.mxu0 %v1151
    %2575 = vmatmul.bf16.gmra.mxu0 %v1460
    %v2576 = vpop.f32.mrf.mxu0
    %v2577 = vadd.f32 %v367, %v2576
    %v2578 = vpop.f32.mrf.mxu0
    %2579 = vdwg.mxu0
    %2580 = vmatpush.bf16.msra.mxu0 0
    %2581 = vmatpush.bf16.msra.mxu0 0
    %2582 = vmatpush.bf16.msra.mxu0 0
    %2583 = vmatpush.bf16.msra.mxu0 0
    %2584 = vmatpush.bf16.msra.mxu0 0
    %2585 = vmatpush.bf16.msra.mxu0 0
    %2586 = vmatpush.bf16.msra.mxu0 %v1250
    %2587 = vmatpush.bf16.msra.mxu0 %v1152
    %2588 = vmatmul.bf16.gmra.mxu0 %v1460
    %v2589 = vpop.f32.mrf.mxu0
    %v2590 = vadd.f32 %v368, %v2589
    %v2591 = vpop.f32.mrf.mxu0
    %2592 = vdwg.mxu0
    %2593 = vmatpush.bf16.msra.mxu0 0
    %2594 = vmatpush.bf16.msra.mxu0 0
    %2595 = vmatpush.bf16.msra.mxu0 0
    %2596 = vmatpush.bf16.msra.mxu0 0
    %2597 = vmatpush.bf16.msra.mxu0 0
    %2598 = vmatpush.bf16.msra.mxu0 0
    %2599 = vmatpush.bf16.msra.mxu0 %v1251
    %2600 = vmatpush.bf16.msra.mxu0 %v1153
    %2601 = vmatmul.bf16.gmra.mxu0 %v1460
    %v2602 = vpop.f32.mrf.mxu0
    %v2603 = vadd.f32 %v369, %v2602
    %v2604 = vpop.f32.mrf.mxu0
    %2605 = vdwg.mxu0
    %2606 = vmatpush.bf16.msra.mxu0 0
    %2607 = vmatpush.bf16.msra.mxu0 0
    %2608 = vmatpush.bf16.msra.mxu0 0
    %2609 = vmatpush.bf16.msra.mxu0 0
    %2610 = vmatpush.bf16.msra.mxu0 0
    %2611 = vmatpush.bf16.msra.mxu0 0
    %2612 = vmatpush.bf16.msra.mxu0 %v1252
    %2613 = vmatpush.bf16.msra.mxu0 %v1154
    %2614 = vmatmul.bf16.gmra.mxu0 %v1460
    %v2615 = vpop.f32.mrf.mxu0
    %v2616 = vadd.f32 %v370, %v2615
    %v2617 = vpop.f32.mrf.mxu0
    %2618 = vdwg.mxu0
    %2619 = vmatpush.bf16.msra.mxu0 0
    %2620 = vmatpush.bf16.msra.mxu0 0
    %2621 = vmatpush.bf16.msra.mxu0 0
    %2622 = vmatpush.bf16.msra.mxu0 0
    %2623 = vmatpush.bf16.msra.mxu0 0
    %2624 = vmatpush.bf16.msra.mxu0 0
    %2625 = vmatpush.bf16.msra.mxu0 %v1253
    %2626 = vmatpush.bf16.msra.mxu0 %v1155
    %2627 = vmatmul.bf16.gmra.mxu0 %v1460
    %v2628 = vpop.f32.mrf.mxu0
    %v2629 = vadd.f32 %v371, %v2628
    %v2630 = vpop.f32.mrf.mxu0
    %2631 = vdwg.mxu0
    %2632 = vmatpush.bf16.msra.mxu0 0
    %2633 = vmatpush.bf16.msra.mxu0 0
    %2634 = vmatpush.bf16.msra.mxu0 0
    %2635 = vmatpush.bf16.msra.mxu0 0
    %2636 = vmatpush.bf16.msra.mxu0 0
    %2637 = vmatpush.bf16.msra.mxu0 0
    %2638 = vmatpush.bf16.msra.mxu0 %v1254
    %2639 = vmatpush.bf16.msra.mxu0 %v1156
    %2640 = vmatmul.bf16.gmra.mxu0 %v1460
    %v2641 = vpop.f32.mrf.mxu0
    %v2642 = vadd.f32 %v372, %v2641
    %v2643 = vpop.f32.mrf.mxu0
    %2644 = vdwg.mxu0
    %2645 = vmatpush.bf16.msra.mxu0 0
    %2646 = vmatpush.bf16.msra.mxu0 0
    %2647 = vmatpush.bf16.msra.mxu0 0
    %2648 = vmatpush.bf16.msra.mxu0 0
    %2649 = vmatpush.bf16.msra.mxu0 0
    %2650 = vmatpush.bf16.msra.mxu0 0
    %2651 = vmatpush.bf16.msra.mxu0 %v1255
    %2652 = vmatpush.bf16.msra.mxu0 %v1157
    %2653 = vmatmul.bf16.gmra.mxu0 %v1460
    %v2654 = vpop.f32.mrf.mxu0
    %v2655 = vadd.f32 %v373, %v2654
    %v2656 = vpop.f32.mrf.mxu0
    %2657 = vdwg.mxu0
    %2658 = vmatpush.bf16.msra.mxu0 0
    %2659 = vmatpush.bf16.msra.mxu0 0
    %2660 = vmatpush.bf16.msra.mxu0 0
    %2661 = vmatpush.bf16.msra.mxu0 0
    %2662 = vmatpush.bf16.msra.mxu0 0
    %2663 = vmatpush.bf16.msra.mxu0 0
    %2664 = vmatpush.bf16.msra.mxu0 %v1256
    %2665 = vmatpush.bf16.msra.mxu0 %v1158
    %2666 = vmatmul.bf16.gmra.mxu0 %v1460
    %v2667 = vpop.f32.mrf.mxu0
    %v2668 = vadd.f32 %v374, %v2667
    %v2669 = vpop.f32.mrf.mxu0
    %2670 = vdwg.mxu0
    %2671 = vmatpush.bf16.msra.mxu0 0
    %2672 = vmatpush.bf16.msra.mxu0 0
    %2673 = vmatpush.bf16.msra.mxu0 0
    %2674 = vmatpush.bf16.msra.mxu0 0
    %2675 = vmatpush.bf16.msra.mxu0 0
    %2676 = vmatpush.bf16.msra.mxu0 0
    %2677 = vmatpush.bf16.msra.mxu0 %v1257
    %2678 = vmatpush.bf16.msra.mxu0 %v1159
    %2679 = vmatmul.bf16.gmra.mxu0 %v1460
    %v2680 = vpop.f32.mrf.mxu0
    %v2681 = vadd.f32 %v375, %v2680
    %v2682 = vpop.f32.mrf.mxu0
    %2683 = vdwg.mxu0
    %2684 = vmatpush.bf16.msra.mxu0 0
    %2685 = vmatpush.bf16.msra.mxu0 0
    %2686 = vmatpush.bf16.msra.mxu0 0
    %2687 = vmatpush.bf16.msra.mxu0 0
    %2688 = vmatpush.bf16.msra.mxu0 0
    %2689 = vmatpush.bf16.msra.mxu0 0
    %2690 = vmatpush.bf16.msra.mxu0 %v1258
    %2691 = vmatpush.bf16.msra.mxu0 %v1160
    %2692 = vmatmul.bf16.gmra.mxu0 %v1460
    %v2693 = vpop.f32.mrf.mxu0
    %v2694 = vadd.f32 %v376, %v2693
    %v2695 = vpop.f32.mrf.mxu0
    %2696 = vdwg.mxu0
    %2697 = vmatpush.bf16.msra.mxu0 0
    %2698 = vmatpush.bf16.msra.mxu0 0
    %2699 = vmatpush.bf16.msra.mxu0 0
    %2700 = vmatpush.bf16.msra.mxu0 0
    %2701 = vmatpush.bf16.msra.mxu0 0
    %2702 = vmatpush.bf16.msra.mxu0 0
    %2703 = vmatpush.bf16.msra.mxu0 %v1259
    %2704 = vmatpush.bf16.msra.mxu0 %v1161
    %2705 = vmatmul.bf16.gmra.mxu0 %v1460
    %v2706 = vpop.f32.mrf.mxu0
    %v2707 = vadd.f32 %v377, %v2706
    %v2708 = vpop.f32.mrf.mxu0
    %2709 = vdwg.mxu0
    %2710 = vmatpush.bf16.msra.mxu0 0
    %2711 = vmatpush.bf16.msra.mxu0 0
    %2712 = vmatpush.bf16.msra.mxu0 0
    %2713 = vmatpush.bf16.msra.mxu0 0
    %2714 = vmatpush.bf16.msra.mxu0 0
    %2715 = vmatpush.bf16.msra.mxu0 0
    %2716 = vmatpush.bf16.msra.mxu0 %v1260
    %2717 = vmatpush.bf16.msra.mxu0 %v1162
    %2718 = vmatmul.bf16.gmra.mxu0 %v1460
    %v2719 = vpop.f32.mrf.mxu0
    %v2720 = vadd.f32 %v378, %v2719
    %v2721 = vpop.f32.mrf.mxu0
    %2722 = vdwg.mxu0
    %2723 = vmatpush.bf16.msra.mxu0 0
    %2724 = vmatpush.bf16.msra.mxu0 0
    %2725 = vmatpush.bf16.msra.mxu0 0
    %2726 = vmatpush.bf16.msra.mxu0 0
    %2727 = vmatpush.bf16.msra.mxu0 0
    %2728 = vmatpush.bf16.msra.mxu0 0
    %2729 = vmatpush.bf16.msra.mxu0 %v1261
    %2730 = vmatpush.bf16.msra.mxu0 %v1163
    %2731 = vmatmul.bf16.gmra.mxu0 %v1460
    %v2732 = vpop.f32.mrf.mxu0
    %v2733 = vadd.f32 %v379, %v2732
    %v2734 = vpop.f32.mrf.mxu0
    %2735 = vdwg.mxu0
    %v2736 = vpack.c.bf16 %v1485, %v1472
    %v2737 = vpack.c.bf16 %v1511, %v1498
    %v2738 = vpack.c.bf16 %v1537, %v1524
    %v2739 = vpack.c.bf16 %v1563, %v1550
    %v2740 = vpack.c.bf16 %v1589, %v1576
    %v2741 = vpack.c.bf16 %v1615, %v1602
    %v2742 = vpack.c.bf16 %v1641, %v1628
    %v2743 = vpack.c.bf16 %v1667, %v1654
    %v2744 = vpack.c.bf16 %v1693, %v1680
    %v2745 = vpack.c.bf16 %v1719, %v1706
    %v2746 = vpack.c.bf16 %v1745, %v1732
    %v2747 = vpack.c.bf16 %v1771, %v1758
    %v2748 = vpack.c.bf16 %v1797, %v1784
    %v2749 = vpack.c.bf16 %v1823, %v1810
    %v2750 = vpack.c.bf16 %v1849, %v1836
    %v2751 = vpack.c.bf16 %v1875, %v1862
    %v2752 = vpack.c.bf16 %v1901, %v1888
    %v2753 = vpack.c.bf16 %v1927, %v1914
    %v2754 = vpack.c.bf16 %v1953, %v1940
    %v2755 = vpack.c.bf16 %v1979, %v1966
    %v2756 = vpack.c.bf16 %v2005, %v1992
    %v2757 = vpack.c.bf16 %v2031, %v2018
    %v2758 = vpack.c.bf16 %v2057, %v2044
    %v2759 = vpack.c.bf16 %v2083, %v2070
    %v2760 = vpack.c.bf16 %v2109, %v2096
    %v2761 = vpack.c.bf16 %v2135, %v2122
    %v2762 = vpack.c.bf16 %v2161, %v2148
    %v2763 = vpack.c.bf16 %v2187, %v2174
    %v2764 = vpack.c.bf16 %v2213, %v2200
    %v2765 = vpack.c.bf16 %v2239, %v2226
    %v2766 = vpack.c.bf16 %v2265, %v2252
    %v2767 = vpack.c.bf16 %v2291, %v2278
    %v2768 = vpack.c.bf16 %v2317, %v2304
    %v2769 = vpack.c.bf16 %v2343, %v2330
    %v2770 = vpack.c.bf16 %v2369, %v2356
    %v2771 = vpack.c.bf16 %v2395, %v2382
    %v2772 = vpack.c.bf16 %v2421, %v2408
    %v2773 = vpack.c.bf16 %v2447, %v2434
    %v2774 = vpack.c.bf16 %v2473, %v2460
    %v2775 = vpack.c.bf16 %v2499, %v2486
    %v2776 = vpack.c.bf16 %v2525, %v2512
    %v2777 = vpack.c.bf16 %v2551, %v2538
    %v2778 = vpack.c.bf16 %v2577, %v2564
    %v2779 = vpack.c.bf16 %v2603, %v2590
    %v2780 = vpack.c.bf16 %v2629, %v2616
    %v2781 = vpack.c.bf16 %v2655, %v2642
    %v2782 = vpack.c.bf16 %v2681, %v2668
    %v2783 = vpack.c.bf16 %v2707, %v2694
    %v2784 = vpack.c.bf16 %v2733, %v2720
    %v2834 = vrot.slane %v2736, 3
    %v2835 = vrot.slane %v2737, 6
    %v2836 = vrot.slane %v2737, 1
    %v2837 = vrot.slane %v2738, 4
    %v2838 = vrot.slane %v2738, 7
    %v2839 = vrot.slane %v2739, 2
    %v2840 = vrot.slane %v2739, 5
    %v2841 = vrot.slane %v2740, 3
    %v2842 = vrot.slane %v2741, 6
    %v2843 = vrot.slane %v2741, 1
    %v2844 = vrot.slane %v2742, 4
    %v2845 = vrot.slane %v2742, 7
    %v2846 = vrot.slane %v2743, 2
    %v2847 = vrot.slane %v2743, 5
    %v2848 = vrot.slane %v2744, 3
    %v2849 = vrot.slane %v2745, 6
    %v2850 = vrot.slane %v2745, 1
    %v2851 = vrot.slane %v2746, 4
    %v2852 = vrot.slane %v2746, 7
    %v2853 = vrot.slane %v2747, 2
    %v2854 = vrot.slane %v2747, 5
    %v2855 = vrot.slane %v2748, 3
    %v2856 = vrot.slane %v2749, 6
    %v2857 = vrot.slane %v2749, 1
    %v2858 = vrot.slane %v2750, 4
    %v2859 = vrot.slane %v2750, 7
    %v2860 = vrot.slane %v2751, 2
    %v2861 = vrot.slane %v2751, 5
    %v2862 = vrot.slane %v2752, 3
    %v2863 = vrot.slane %v2753, 6
    %v2864 = vrot.slane %v2753, 1
    %v2865 = vrot.slane %v2754, 4
    %v2866 = vrot.slane %v2754, 7
    %v2867 = vrot.slane %v2755, 2
    %v2868 = vrot.slane %v2755, 5
    %v2869 = vrot.slane %v2756, 3
    %v2870 = vrot.slane %v2757, 6
    %v2871 = vrot.slane %v2757, 1
    %v2872 = vrot.slane %v2758, 4
    %v2873 = vrot.slane %v2758, 7
    %v2874 = vrot.slane %v2759, 2
    %v2875 = vrot.slane %v2759, 5
    %v2876 = vrot.slane %v2760, 3
    %v2877 = vrot.slane %v2761, 6
    %v2878 = vrot.slane %v2761, 1
    %v2879 = vrot.slane %v2762, 4
    %v2880 = vrot.slane %v2762, 7
    %v2881 = vrot.slane %v2763, 2
    %v2882 = vrot.slane %v2763, 5
    %v2883 = vrot.slane %v2764, 3
    %v2884 = vrot.slane %v2765, 6
    %v2885 = vrot.slane %v2765, 1
    %v2886 = vrot.slane %v2766, 4
    %v2887 = vrot.slane %v2766, 7
    %v2888 = vrot.slane %v2767, 2
    %v2889 = vrot.slane %v2767, 5
    %v2890 = vrot.slane %v2768, 3
    %v2891 = vrot.slane %v2769, 6
    %v2892 = vrot.slane %v2769, 1
    %v2893 = vrot.slane %v2770, 4
    %v2894 = vrot.slane %v2770, 7
    %v2895 = vrot.slane %v2771, 2
    %v2896 = vrot.slane %v2771, 5
    %v2897 = vrot.slane %v2772, 3
    %v2898 = vrot.slane %v2773, 6
    %v2899 = vrot.slane %v2773, 1
    %v2900 = vrot.slane %v2774, 4
    %v2901 = vrot.slane %v2774, 7
    %v2902 = vrot.slane %v2775, 2
    %v2903 = vrot.slane %v2775, 5
    %v2904 = vrot.slane %v2776, 3
    %v2905 = vrot.slane %v2777, 6
    %v2906 = vrot.slane %v2777, 1
    %v2907 = vrot.slane %v2778, 4
    %v2908 = vrot.slane %v2778, 7
    %v2909 = vrot.slane %v2779, 2
    %v2910 = vrot.slane %v2779, 5
    %v2911 = vrot.slane %v2780, 3
    %v2912 = vrot.slane %v2781, 6
    %v2913 = vrot.slane %v2781, 1
    %v2914 = vrot.slane %v2782, 4
    %v2915 = vrot.slane %v2782, 7
    %v2916 = vrot.slane %v2783, 2
    %v2917 = vrot.slane %v2783, 5
    %v2918 = vrot.slane %v2784, 3
    %vm2919 = vcmask 1040384
    %v2922 = vsel %vm2919, %v2736, %v2834
    %vm2923 = vcmask 1042434
    %v2926 = vsel %vm2923, %v2835, %v2836
    %vm2927 = vcmask 1041408
    %v2928 = vsel %vm2927, %v2922, %v2926
    %vm2929 = vcmask 1044484
    %v2932 = vsel %vm2929, %v2837, %v2838
    %vm2933 = vcmask 1046534
    %v2936 = vsel %vm2933, %v2839, %v2840
    %vm2937 = vcmask 1045508
    %v2938 = vsel %vm2937, %v2932, %v2936
    %vm2939 = vcmask 1043456
    %v2940 = vsel %vm2939, %v2928, %v2938
    %v2943 = vsel %vm2919, %v2740, %v2841
    %v2946 = vsel %vm2923, %v2842, %v2843
    %v2947 = vsel %vm2927, %v2943, %v2946
    %v2950 = vsel %vm2929, %v2844, %v2845
    %v2953 = vsel %vm2933, %v2846, %v2847
    %v2954 = vsel %vm2937, %v2950, %v2953
    %v2955 = vsel %vm2939, %v2947, %v2954
    %v2958 = vsel %vm2919, %v2744, %v2848
    %v2961 = vsel %vm2923, %v2849, %v2850
    %v2962 = vsel %vm2927, %v2958, %v2961
    %v2965 = vsel %vm2929, %v2851, %v2852
    %v2968 = vsel %vm2933, %v2853, %v2854
    %v2969 = vsel %vm2937, %v2965, %v2968
    %v2970 = vsel %vm2939, %v2962, %v2969
    %v2973 = vsel %vm2919, %v2748, %v2855
    %v2976 = vsel %vm2923, %v2856, %v2857
    %v2977 = vsel %vm2927, %v2973, %v2976
    %v2980 = vsel %vm2929, %v2858, %v2859
    %v2983 = vsel %vm2933, %v2860, %v2861
    %v2984 = vsel %vm2937, %v2980, %v2983
    %v2985 = vsel %vm2939, %v2977, %v2984
    %v2988 = vsel %vm2919, %v2752, %v2862
    %v2991 = vsel %vm2923, %v2863, %v2864
    %v2992 = vsel %vm2927, %v2988, %v2991
    %v2995 = vsel %vm2929, %v2865, %v2866
    %v2998 = vsel %vm2933, %v2867, %v2868
    %v2999 = vsel %vm2937, %v2995, %v2998
    %v3000 = vsel %vm2939, %v2992, %v2999
    %v3003 = vsel %vm2919, %v2756, %v2869
    %v3006 = vsel %vm2923, %v2870, %v2871
    %v3007 = vsel %vm2927, %v3003, %v3006
    %v3010 = vsel %vm2929, %v2872, %v2873
    %v3013 = vsel %vm2933, %v2874, %v2875
    %v3014 = vsel %vm2937, %v3010, %v3013
    %v3015 = vsel %vm2939, %v3007, %v3014
    %v3018 = vsel %vm2919, %v2760, %v2876
    %v3021 = vsel %vm2923, %v2877, %v2878
    %v3022 = vsel %vm2927, %v3018, %v3021
    %v3025 = vsel %vm2929, %v2879, %v2880
    %v3028 = vsel %vm2933, %v2881, %v2882
    %v3029 = vsel %vm2937, %v3025, %v3028
    %v3030 = vsel %vm2939, %v3022, %v3029
    %v3033 = vsel %vm2919, %v2764, %v2883
    %v3036 = vsel %vm2923, %v2884, %v2885
    %v3037 = vsel %vm2927, %v3033, %v3036
    %v3040 = vsel %vm2929, %v2886, %v2887
    %v3043 = vsel %vm2933, %v2888, %v2889
    %v3044 = vsel %vm2937, %v3040, %v3043
    %v3045 = vsel %vm2939, %v3037, %v3044
    %v3048 = vsel %vm2919, %v2768, %v2890
    %v3051 = vsel %vm2923, %v2891, %v2892
    %v3052 = vsel %vm2927, %v3048, %v3051
    %v3055 = vsel %vm2929, %v2893, %v2894
    %v3058 = vsel %vm2933, %v2895, %v2896
    %v3059 = vsel %vm2937, %v3055, %v3058
    %v3060 = vsel %vm2939, %v3052, %v3059
    %v3063 = vsel %vm2919, %v2772, %v2897
    %v3066 = vsel %vm2923, %v2898, %v2899
    %v3067 = vsel %vm2927, %v3063, %v3066
    %v3070 = vsel %vm2929, %v2900, %v2901
    %v3073 = vsel %vm2933, %v2902, %v2903
    %v3074 = vsel %vm2937, %v3070, %v3073
    %v3075 = vsel %vm2939, %v3067, %v3074
    %v3078 = vsel %vm2919, %v2776, %v2904
    %v3081 = vsel %vm2923, %v2905, %v2906
    %v3082 = vsel %vm2927, %v3078, %v3081
    %v3085 = vsel %vm2929, %v2907, %v2908
    %v3088 = vsel %vm2933, %v2909, %v2910
    %v3089 = vsel %vm2937, %v3085, %v3088
    %v3090 = vsel %vm2939, %v3082, %v3089
    %v3093 = vsel %vm2919, %v2780, %v2911
    %v3096 = vsel %vm2923, %v2912, %v2913
    %v3097 = vsel %vm2927, %v3093, %v3096
    %v3100 = vsel %vm2929, %v2914, %v2915
    %v3103 = vsel %vm2933, %v2916, %v2917
    %v3104 = vsel %vm2937, %v3100, %v3103
    %v3105 = vsel %vm2939, %v3097, %v3104
    %v3108 = vsel %vm2919, %v2784, %v2918
    %3122 = vst [vmem:[#allocation8] sm:$0xff] %v2940
    %3123 = vst [vmem:[#allocation8 + $0x8] sm:$0xff] %v2955
    %3124 = vst [vmem:[#allocation8 + $0x10] sm:$0xff] %v2970
    %3125 = vst [vmem:[#allocation8 + $0x18] sm:$0xff] %v2985
    %3126 = vst [vmem:[#allocation8 + $0x20] sm:$0xff] %v3000
    %3127 = vst [vmem:[#allocation8 + $0x28] sm:$0xff] %v3015
    %3128 = vst [vmem:[#allocation8 + $0x30] sm:$0xff] %v3030
    %3129 = vst [vmem:[#allocation8 + $0x38] sm:$0xff] %v3045
    %3130 = vst [vmem:[#allocation8 + $0x40] sm:$0xff] %v3060
    %3131 = vst [vmem:[#allocation8 + $0x48] sm:$0xff] %v3075
    %3132 = vst [vmem:[#allocation8 + $0x50] sm:$0xff] %v3090
    %3133 = vst [vmem:[#allocation8 + $0x58] sm:$0xff] %v3105
    %3134 = vst [vmem:[#allocation8 + $0x60] sm:$0x3] %v3108
    // Predicated region
    $region26: #{tpu_custom_call.1} parent=1 // pred_check
      _
    $region27: #{tpu_custom_call.1} parent=1 // pred_check_branch
      %3136 = sbr.rel (0) target = $region29
    $region28: #{tpu_custom_call.1} parent=1 // pred_region
      %3138 = vsyncadd [#allocation4], 0
      %s3140 = sshll.u32 [#allocation8], 4
      %s3141 = int_to_ptr.vmem [resolvable:$true] %s3140
      %s3142 = sshll.u32 %s3, 4
      %s3143 = int_to_ptr.hbm [resolvable:$true] %s3142
      %3145 = dma.vmem_to_hbm [thread:$0]  %s3141, 1568, %s3143, [#allocation4]
    $region29: #{tpu_custom_call.1} parent=1 // pred_fallthru
      _
    // Predicated region
    $region30: #{tpu_custom_call.1} parent=1 // pred_check
      _
    $region31: #{tpu_custom_call.1} parent=1 // pred_check_branch
      %3147 = sbr.rel (0) target = $region33
    $region32: #{tpu_custom_call.1} parent=1 // pred_region
      %3149 = dma.done [#allocation4], 1568
    $region33: #{tpu_custom_call.1} parent=1 // pred_fallthru
      _
    %3150 = vsyncpa [#allocation3], 1
    %3151 = vsyncpa [#allocation6], 1
    %3152 = vsyncpa [#allocation4], 1

</llo_original>
